<compile_context>
chip_gen: v6e
topology: v6e:2x2x1
jax: 0.10.0
libtpu: 0.0.40
codegen_flags: <defaults>
</compile_context>

<pallas_src>
import functools

import jax
import jax.numpy as jnp
from jax.experimental import pallas as pl
from jax.experimental.pallas import tpu as pltpu


def _parallel_mlp_kernel(x1_ref, x2_ref,
                         w1_ref, b1_ref,
                         w2_ref, b2_ref,
                         w3_ref, b3_ref,
                         o_ref, *, d1):
    # Per grid step (whole ensemble E folded into every block):
    #   x1_ref: (E, bt, d1)    x2_ref: (E, bt, d2)
    #   w1_ref: (E, d1+d2, H)  b1_ref: (E, 1, H)
    #   w2_ref: (E, H, H)      b2_ref: (E, 1, H)
    #   w3_ref: (E, H, D_out)  b3_ref: (E, 1, D_out)
    #   o_ref : (E, bt, D_out)
    x1 = x1_ref[...]
    x2 = x2_ref[...]
    w1 = w1_ref[...]

    # Layer 1: concat(x1, x2) @ w1 == x1 @ w1[:, :d1] + x2 @ w1[:, d1:]
    h = jnp.einsum('ebd,edh->ebh', x1, w1[:, :d1, :],
                   preferred_element_type=jnp.float32)
    h = h + jnp.einsum('ebd,edh->ebh', x2, w1[:, d1:, :],
                       preferred_element_type=jnp.float32)
    h = jnp.maximum(h + b1_ref[...].astype(jnp.float32), 0.0)

    # Layer 2 (cast activations back to the weight dtype for bf16 MXU rate).
    h = h.astype(w2_ref.dtype)
    h = jnp.einsum('ebh,ehk->ebk', h, w2_ref[...],
                   preferred_element_type=jnp.float32)
    h = jnp.maximum(h + b2_ref[...].astype(jnp.float32), 0.0)

    # Output layer (no activation).
    h = h.astype(w3_ref.dtype)
    out = jnp.einsum('ebh,eho->ebo', h, w3_ref[...],
                     preferred_element_type=jnp.float32)
    out = out + b3_ref[...].astype(jnp.float32)
    o_ref[...] = out.astype(o_ref.dtype)


def parallel_mlp_forward(x1, x2, params, *, batch_tile=None):
    """Ensemble MLP forward. x1: (E, B, d1), x2: (E, B, d2) -> (E, B, D_out)."""
    w1, b1, w2, b2, w3, b3 = params
    E, B, d1 = x1.shape
    d2 = x2.shape[-1]
    D_in = d1 + d2
    H = w1.shape[-1]
    D_out = w3.shape[-1]
    assert w1.shape == (E, D_in, H)
    assert x2.shape[:2] == (E, B)

    # Batch tiling: one step covers the (small) whole batch; for large B the
    # batch axis becomes a "parallel" grid axis while weights stay resident.
    if batch_tile is None:
        batch_tile = B if B <= 512 else 512
    assert B % batch_tile == 0, "batch must be divisible by batch_tile"
    if batch_tile != B:
        assert batch_tile % 8 == 0, "batch_tile must be a multiple of 8"
    num_tiles = B // batch_tile

    def batched(shape):   # blocks that advance with the batch-tile index
        return pl.BlockSpec((shape[0], batch_tile, shape[2]),
                            lambda i: (0, i, 0))

    def resident(shape):  # weights / biases: same block every grid step
        return pl.BlockSpec(shape, lambda i: (0, 0, 0))

    kernel = functools.partial(_parallel_mlp_kernel, d1=d1)

    return pl.pallas_call(
        kernel,
        out_shape=jax.ShapeDtypeStruct((E, B, D_out), x1.dtype),
        grid_spec=pltpu.PrefetchScalarGridSpec(
            num_scalar_prefetch=0,
            grid=(num_tiles,),
            in_specs=[
                batched(x1.shape), batched(x2.shape),
                resident(w1.shape), resident(b1.shape),
                resident(w2.shape), resident(b2.shape),
                resident(w3.shape), resident(b3.shape),
            ],
            out_specs=batched((E, B, D_out)),
        ),
        compiler_params=pltpu.CompilerParams(
            dimension_semantics=("parallel",)),
    )(x1, x2, w1, b1, w2, b2, w3, b3)


def init_parallel_mlp_params(key, input_dim, hidden_dim, output_dim,
                             ensemble_size, bias_const=0.0, init_w=0.003,
                             dtype=jnp.float32):
    """Init matching the PyTorch module's shapes / init scheme.

    h1/h2 weights: fanin_init (uniform(-1/sqrt(fan_in), 1/sqrt(fan_in))),
    output weights: uniform(-init_w, init_w); hidden biases 0, output bias
    bias_const (fanin_init only touches weights).
    """
    k1, k2, k3 = jax.random.split(key, 3)

    def fanin(k, shape):
        bound = 1.0 / jnp.sqrt(jnp.asarray(shape[1], dtype))
        return jax.random.uniform(k, shape, dtype, minval=-bound, maxval=bound)

    w1 = fanin(k1, (ensemble_size, input_dim, hidden_dim))
    b1 = jnp.zeros((ensemble_size, 1, hidden_dim), dtype)
    w2 = fanin(k2, (ensemble_size, hidden_dim, hidden_dim))
    b2 = jnp.zeros((ensemble_size, 1, hidden_dim), dtype)
    w3 = jax.random.uniform(k3, (ensemble_size, hidden_dim, output_dim),
                            dtype, minval=-init_w, maxval=init_w)
    b3 = jnp.full((ensemble_size, 1, output_dim), bias_const, dtype)
    return (w1, b1, w2, b2, w3, b3)


def _reference_forward(x1, x2, params):
    """Pure-JAX reference mirroring the PyTorch einsum semantics."""
    w1, b1, w2, b2, w3, b3 = params
    x = jnp.concatenate([x1, x2], axis=-1)
    h = jax.nn.relu(jnp.einsum('bij,bjk->bik', x, w1) + b1)
    h = jax.nn.relu(jnp.einsum('bij,bjk->bik', h, w2) + b2)
    return jnp.einsum('bij,bjk->bik', h, w3) + b3


if __name__ == "__main__":
    key = jax.random.PRNGKey(0)
    k_p, k_x1, k_x2 = jax.random.split(key, 3)

    ensemble_size = 4
    batch = 8
    d1, d2 = 16, 16            # x1 / x2 feature dims -> input_dim = 32
    input_dim = d1 + d2
    hidden_dim = 32
    output_dim = 8

    params = init_parallel_mlp_params(
        k_p, input_dim, hidden_dim, output_dim, ensemble_size)

    x1 = jax.random.normal(k_x1, (ensemble_size, batch, d1), jnp.float32)
    x2 = jax.random.normal(k_x2, (ensemble_size, batch, d2), jnp.float32)

    # f32 path: exact check against the pure-JAX reference.
    out = jax.block_until_ready(parallel_mlp_forward(x1, x2, params))
    ref = _reference_forward(x1, x2, params)
    assert out.shape == (ensemble_size, batch, output_dim)
    assert jnp.allclose(out, ref, atol=1e-5, rtol=1e-5)

    # bf16 operands (full-rate MXU on v6e/v7x), f32 in-kernel accumulation.
    to_bf16 = lambda t: t.astype(jnp.bfloat16)
    params_bf16 = tuple(to_bf16(p) for p in params)
    out_bf16 = jax.block_until_ready(
        parallel_mlp_forward(to_bf16(x1), to_bf16(x2), params_bf16))
    ref_bf16 = _reference_forward(
        to_bf16(x1).astype(jnp.float32),
        to_bf16(x2).astype(jnp.float32),
        tuple(p.astype(jnp.float32) for p in params_bf16))
    assert out_bf16.shape == (ensemble_size, batch, output_dim)
    assert jnp.allclose(out_bf16.astype(jnp.float32), ref_bf16,
                        atol=5e-2, rtol=5e-2)

    print("KERNEL_OK")
</pallas_src>

<mosaic_0001>
module attributes {stable_mosaic.version = 11 : i64} {
  func.func @_parallel_mlp_kernel(%arg0: i32, %arg1: memref<4x8x16xf32, #tpu.memory_space<vmem>>, %arg2: memref<4x8x16xf32, #tpu.memory_space<vmem>>, %arg3: memref<4x32x32xf32, #tpu.memory_space<vmem>>, %arg4: memref<4x1x32xf32, #tpu.memory_space<vmem>>, %arg5: memref<4x32x32xf32, #tpu.memory_space<vmem>>, %arg6: memref<4x1x32xf32, #tpu.memory_space<vmem>>, %arg7: memref<4x32x8xf32, #tpu.memory_space<vmem>>, %arg8: memref<4x1x8xf32, #tpu.memory_space<vmem>>, %arg9: memref<4x8x8xf32, #tpu.memory_space<vmem>>) attributes {dimension_semantics = [#tpu.dimension_semantics<parallel>], iteration_bounds = array<i64: 1>, scalar_prefetch = 0 : i64, scratch_operands = 0 : i64, tpu.core_type = #tpu.core_type<tc>, window_params = [{transform_indices = @transform_0, window_bounds = array<i64: 4, 8, 16>}, {transform_indices = @transform_1, window_bounds = array<i64: 4, 8, 16>}, {pipeline_mode = #tpu.pipeline_mode<synchronous>, transform_indices = @transform_2, window_bounds = array<i64: 4, 32, 32>}, {pipeline_mode = #tpu.pipeline_mode<synchronous>, transform_indices = @transform_3, window_bounds = array<i64: 4, 1, 32>}, {pipeline_mode = #tpu.pipeline_mode<synchronous>, transform_indices = @transform_4, window_bounds = array<i64: 4, 32, 32>}, {pipeline_mode = #tpu.pipeline_mode<synchronous>, transform_indices = @transform_5, window_bounds = array<i64: 4, 1, 32>}, {pipeline_mode = #tpu.pipeline_mode<synchronous>, transform_indices = @transform_6, window_bounds = array<i64: 4, 32, 8>}, {pipeline_mode = #tpu.pipeline_mode<synchronous>, transform_indices = @transform_7, window_bounds = array<i64: 4, 1, 8>}, {transform_indices = @transform_8, window_bounds = array<i64: 4, 8, 8>}]} {
    %c0 = arith.constant 0 : index
    %c0_0 = arith.constant 0 : index
    %c0_1 = arith.constant 0 : index
    %0 = vector.load %arg1[%c0, %c0_0, %c0_1] : memref<4x8x16xf32, #tpu.memory_space<vmem>>, vector<4x8x16xf32>
    %c0_2 = arith.constant 0 : index
    %c0_3 = arith.constant 0 : index
    %c0_4 = arith.constant 0 : index
    %1 = vector.load %arg2[%c0_2, %c0_3, %c0_4] : memref<4x8x16xf32, #tpu.memory_space<vmem>>, vector<4x8x16xf32>
    %c0_5 = arith.constant 0 : index
    %c0_6 = arith.constant 0 : index
    %c0_7 = arith.constant 0 : index
    %2 = vector.load %arg3[%c0_5, %c0_6, %c0_7] : memref<4x32x32xf32, #tpu.memory_space<vmem>>, vector<4x32x32xf32>
    %3 = vector.extract_strided_slice %2 {offsets = [0, 0, 0], sizes = [4, 16, 32], strides = [1, 1, 1]} : vector<4x32x32xf32> to vector<4x16x32xf32>
    "tpu.trace_start"() <{level = 10 : i32, message = "ebd,edh->ebh"}> : () -> ()
    %cst = arith.constant dense<0.000000e+00> : vector<4x8x32xf32>
    %4 = tpu.matmul %0, %3, %cst {dimension_numbers = #tpu.dot_dimension_numbers<[2], [1], [1], [2], [0, 0, 0, 1, 1, 2], [0], [0]>} : vector<4x8x16xf32>, vector<4x16x32xf32>, vector<4x8x32xf32> -> vector<4x8x32xf32>
    "tpu.trace_stop"() : () -> ()
    %5 = vector.extract_strided_slice %2 {offsets = [0, 16, 0], sizes = [4, 16, 32], strides = [1, 1, 1]} : vector<4x32x32xf32> to vector<4x16x32xf32>
    "tpu.trace_start"() <{level = 10 : i32, message = "ebd,edh->ebh"}> : () -> ()
    %cst_8 = arith.constant dense<0.000000e+00> : vector<4x8x32xf32>
    %6 = tpu.matmul %1, %5, %cst_8 {dimension_numbers = #tpu.dot_dimension_numbers<[2], [1], [1], [2], [0, 0, 0, 1, 1, 2], [0], [0]>} : vector<4x8x16xf32>, vector<4x16x32xf32>, vector<4x8x32xf32> -> vector<4x8x32xf32>
    "tpu.trace_stop"() : () -> ()
    %7 = arith.addf %4, %6 : vector<4x8x32xf32>
    %c0_9 = arith.constant 0 : index
    %c0_10 = arith.constant 0 : index
    %c0_11 = arith.constant 0 : index
    %8 = vector.load %arg4[%c0_9, %c0_10, %c0_11] : memref<4x1x32xf32, #tpu.memory_space<vmem>>, vector<4x1x32xf32>
    %9 = vector.broadcast %8 : vector<4x1x32xf32> to vector<4x8x32xf32>
    %10 = arith.addf %7, %9 : vector<4x8x32xf32>
    %cst_12 = arith.constant 0.000000e+00 : f32
    %11 = vector.broadcast %cst_12 : f32 to vector<4x8x32xf32>
    %12 = arith.maximumf %10, %11 : vector<4x8x32xf32>
    %c0_13 = arith.constant 0 : index
    %c0_14 = arith.constant 0 : index
    %c0_15 = arith.constant 0 : index
    %13 = vector.load %arg5[%c0_13, %c0_14, %c0_15] : memref<4x32x32xf32, #tpu.memory_space<vmem>>, vector<4x32x32xf32>
    "tpu.trace_start"() <{level = 10 : i32, message = "ebh,ehk->ebk"}> : () -> ()
    %cst_16 = arith.constant dense<0.000000e+00> : vector<4x8x32xf32>
    %14 = tpu.matmul %12, %13, %cst_16 {dimension_numbers = #tpu.dot_dimension_numbers<[2], [1], [1], [2], [0, 0, 0, 1, 1, 2], [0], [0]>} : vector<4x8x32xf32>, vector<4x32x32xf32>, vector<4x8x32xf32> -> vector<4x8x32xf32>
    "tpu.trace_stop"() : () -> ()
    %c0_17 = arith.constant 0 : index
    %c0_18 = arith.constant 0 : index
    %c0_19 = arith.constant 0 : index
    %15 = vector.load %arg6[%c0_17, %c0_18, %c0_19] : memref<4x1x32xf32, #tpu.memory_space<vmem>>, vector<4x1x32xf32>
    %16 = vector.broadcast %15 : vector<4x1x32xf32> to vector<4x8x32xf32>
    %17 = arith.addf %14, %16 : vector<4x8x32xf32>
    %cst_20 = arith.constant 0.000000e+00 : f32
    %18 = vector.broadcast %cst_20 : f32 to vector<4x8x32xf32>
    %19 = arith.maximumf %17, %18 : vector<4x8x32xf32>
    %c0_21 = arith.constant 0 : index
    %c0_22 = arith.constant 0 : index
    %c0_23 = arith.constant 0 : index
    %20 = vector.load %arg7[%c0_21, %c0_22, %c0_23] : memref<4x32x8xf32, #tpu.memory_space<vmem>>, vector<4x32x8xf32>
    "tpu.trace_start"() <{level = 10 : i32, message = "ebh,eho->ebo"}> : () -> ()
    %cst_24 = arith.constant dense<0.000000e+00> : vector<4x8x8xf32>
    %21 = tpu.matmul %19, %20, %cst_24 {dimension_numbers = #tpu.dot_dimension_numbers<[2], [1], [1], [2], [0, 0, 0, 1, 1, 2], [0], [0]>} : vector<4x8x32xf32>, vector<4x32x8xf32>, vector<4x8x8xf32> -> vector<4x8x8xf32>
    "tpu.trace_stop"() : () -> ()
    %c0_25 = arith.constant 0 : index
    %c0_26 = arith.constant 0 : index
    %c0_27 = arith.constant 0 : index
    %22 = vector.load %arg8[%c0_25, %c0_26, %c0_27] : memref<4x1x8xf32, #tpu.memory_space<vmem>>, vector<4x1x8xf32>
    %23 = vector.broadcast %22 : vector<4x1x8xf32> to vector<4x8x8xf32>
    %24 = arith.addf %21, %23 : vector<4x8x8xf32>
    %c0_28 = arith.constant 0 : index
    %c0_29 = arith.constant 0 : index
    %c0_30 = arith.constant 0 : index
    %25 = vector.load %arg9[%c0_28, %c0_29, %c0_30] : memref<4x8x8xf32, #tpu.memory_space<vmem>>, vector<4x8x8xf32>
    tpu.vector_store %arg9[%c0_28, %c0_29, %c0_30], %24 {strides = array<i32>} : memref<4x8x8xf32, #tpu.memory_space<vmem>>, vector<4x8x8xf32>,
    return
  }
  func.func @transform_0(%arg0: i32) -> (i32, i32, i32) {
    %c0_i32 = arith.constant 0 : i32
    %c0_i32_0 = arith.constant 0 : i32
    %c0_i32_1 = arith.constant 0 : i32
    return %c0_i32, %arg0, %c0_i32_0 : i32, i32, i32
  }
  func.func @transform_1(%arg0: i32) -> (i32, i32, i32) {
    %c0_i32 = arith.constant 0 : i32
    %c0_i32_0 = arith.constant 0 : i32
    %c0_i32_1 = arith.constant 0 : i32
    return %c0_i32, %arg0, %c0_i32_0 : i32, i32, i32
  }
  func.func @transform_2(%arg0: i32) -> (i32, i32, i32) {
    %c0_i32 = arith.constant 0 : i32
    %c0_i32_0 = arith.constant 0 : i32
    %c0_i32_1 = arith.constant 0 : i32
    %c0_i32_2 = arith.constant 0 : i32
    return %c0_i32, %c0_i32_0, %c0_i32_1 : i32, i32, i32
  }
  func.func @transform_3(%arg0: i32) -> (i32, i32, i32) {
    %c0_i32 = arith.constant 0 : i32
    %c0_i32_0 = arith.constant 0 : i32
    %c0_i32_1 = arith.constant 0 : i32
    %c0_i32_2 = arith.constant 0 : i32
    return %c0_i32, %c0_i32_0, %c0_i32_1 : i32, i32, i32
  }
  func.func @transform_4(%arg0: i32) -> (i32, i32, i32) {
    %c0_i32 = arith.constant 0 : i32
    %c0_i32_0 = arith.constant 0 : i32
    %c0_i32_1 = arith.constant 0 : i32
    %c0_i32_2 = arith.constant 0 : i32
    return %c0_i32, %c0_i32_0, %c0_i32_1 : i32, i32, i32
  }
  func.func @transform_5(%arg0: i32) -> (i32, i32, i32) {
    %c0_i32 = arith.constant 0 : i32
    %c0_i32_0 = arith.constant 0 : i32
    %c0_i32_1 = arith.constant 0 : i32
    %c0_i32_2 = arith.constant 0 : i32
    return %c0_i32, %c0_i32_0, %c0_i32_1 : i32, i32, i32
  }
  func.func @transform_6(%arg0: i32) -> (i32, i32, i32) {
    %c0_i32 = arith.constant 0 : i32
    %c0_i32_0 = arith.constant 0 : i32
    %c0_i32_1 = arith.constant 0 : i32
    %c0_i32_2 = arith.constant 0 : i32
    return %c0_i32, %c0_i32_0, %c0_i32_1 : i32, i32, i32
  }
  func.func @transform_7(%arg0: i32) -> (i32, i32, i32) {
    %c0_i32 = arith.constant 0 : i32
    %c0_i32_0 = arith.constant 0 : i32
    %c0_i32_1 = arith.constant 0 : i32
    %c0_i32_2 = arith.constant 0 : i32
    return %c0_i32, %c0_i32_0, %c0_i32_1 : i32, i32, i32
  }
  func.func @transform_8(%arg0: i32) -> (i32, i32, i32) {
    %c0_i32 = arith.constant 0 : i32
    %c0_i32_0 = arith.constant 0 : i32
    %c0_i32_1 = arith.constant 0 : i32
    return %c0_i32, %arg0, %c0_i32_0 : i32, i32, i32
  }
}

</mosaic_0001>

<llo_original>
// kernel: tpu_custom_call.1
$region0: #{tpu_custom_call.1}
  #allocation0 [shape = 'u32[]', space=smem, size = 0x4, offset = 0x4, fixed_abs, tag = 'smem constant byte address 0x4 - core index']
  #allocation1 [shape = 'u32[144,128]{1,0:T(1,128)}', space=vmem, size = 0x12000, scoped, tag = 'internal scratch']
  %s0 = inlined_call_operand.vmem [shape: f32[4,8,16], index: 0, kind: input, shape index: {}]
  %s1 = inlined_call_operand.hbm [shape: f32[4,8,16], index: 1, kind: input, shape index: {}]
  %s2 = inlined_call_operand.vmem [shape: f32[4,32,32], index: 2, kind: input, shape index: {}]
  %s3 = inlined_call_operand.vmem [shape: f32[4,1,32], index: 3, kind: input, shape index: {}]
  %s4 = inlined_call_operand.hbm [shape: f32[4,32,32], index: 4, kind: input, shape index: {}]
  %s5 = inlined_call_operand.vmem [shape: f32[4,1,32], index: 5, kind: input, shape index: {}]
  %s6 = inlined_call_operand.vmem [shape: f32[4,32,8], index: 6, kind: input, shape index: {}]
  %s7 = inlined_call_operand.vmem [shape: f32[4,1,8], index: 7, kind: input, shape index: {}]
  %s8 = inlined_call_operand.hbm [shape: f32[4,8,8], index: 8, kind: output, shape index: {}]
  %s9 = sld [smem:[#allocation0]]
  $region50: #{tpu_custom_call.1} parent=0
    _
  %s11 = ssub.s32 1, %s9
  %s12 = scalar_select 0, %s11, %s9
  $region1: #{tpu_custom_call.1} parent=0
    #allocation2 [shape = 'u8[16384]{0}', space=vmem, size = 0x4000, scoped, tag = 'input window, operand 1, single buffered']
    #allocation3 [shape = 's32[1]{0}', space=sflag, size = 0x4, scoped, tag = 'scoped memory for tpu_custom_call.1']
    #allocation4 [shape = 's32[1]{0}', space=sflag, size = 0x4, scoped, tag = 'scoped memory for tpu_custom_call.1']
    #allocation5 [shape = 'u8[65536]{0}', space=vmem, size = 0x10000, scoped, tag = 'input window, operand 4, single buffered']
    #allocation6 [shape = 's32[1]{0}', space=sflag, size = 0x4, scoped, tag = 'scoped memory for tpu_custom_call.1']
    #allocation7 [shape = 'u8[16384]{0}', space=vmem, size = 0x4000, scoped, tag = 'output window, operand 0, single buffered']
    %13 = vsyncpa [#allocation3], 0
    %14 = vsyncpa [#allocation6], 0
    %15 = vsyncpa [#allocation4], 0
    // Predicated region
    $region2: #{tpu_custom_call.1} parent=1 // pred_check
      _
    $region3: #{tpu_custom_call.1} parent=1 // pred_check_branch
      %17 = sbr.rel (0) target = $region5
    $region4: #{tpu_custom_call.1} parent=1 // pred_region
      _
    $region5: #{tpu_custom_call.1} parent=1 // pred_fallthru
      _
    // Predicated region
    $region6: #{tpu_custom_call.1} parent=1 // pred_check
      _
    $region7: #{tpu_custom_call.1} parent=1 // pred_check_branch
      %19 = sbr.rel (0) target = $region9
    $region8: #{tpu_custom_call.1} parent=1 // pred_region
      %s21 = ssub.s32 512, 512
      %22 = vsyncadd [#allocation3], %s21
      %s23 = sshll.u32 [#allocation2], 4
      %s24 = int_to_ptr.vmem [resolvable:$true] %s23
      %29 = dma.hbm_to_vmem [thread:$0]  %s1, 512, %s24, [#allocation3], 128, 128, 8
    $region9: #{tpu_custom_call.1} parent=1 // pred_fallthru
      _
    // Predicated region
    $region10: #{tpu_custom_call.1} parent=1 // pred_check
      _
    $region11: #{tpu_custom_call.1} parent=1 // pred_check_branch
      %31 = sbr.rel (0) target = $region13
    $region12: #{tpu_custom_call.1} parent=1 // pred_region
      _
    $region13: #{tpu_custom_call.1} parent=1 // pred_fallthru
      _
    // Predicated region
    $region14: #{tpu_custom_call.1} parent=1 // pred_check
      _
    $region15: #{tpu_custom_call.1} parent=1 // pred_check_branch
      %33 = sbr.rel (0) target = $region17
    $region16: #{tpu_custom_call.1} parent=1 // pred_region
      _
    $region17: #{tpu_custom_call.1} parent=1 // pred_fallthru
      _
    // Predicated region
    $region18: #{tpu_custom_call.1} parent=1 // pred_check
      _
    $region19: #{tpu_custom_call.1} parent=1 // pred_check_branch
      %35 = sbr.rel (0) target = $region21
    $region20: #{tpu_custom_call.1} parent=1 // pred_region
      %s37 = ssub.s32 2048, 2048
      %38 = vsyncadd [#allocation6], %s37
      %s39 = sshll.u32 [#allocation5], 4
      %s40 = int_to_ptr.vmem [resolvable:$true] %s39
      %45 = dma.hbm_to_vmem [thread:$0]  %s4, 2048, %s40, [#allocation6], 128, 128, 8
    $region21: #{tpu_custom_call.1} parent=1 // pred_fallthru
      _
    // Predicated region
    $region22: #{tpu_custom_call.1} parent=1 // pred_check
      _
    $region23: #{tpu_custom_call.1} parent=1 // pred_check_branch
      %47 = sbr.rel (0) target = $region25
    $region24: #{tpu_custom_call.1} parent=1 // pred_region
      _
    $region25: #{tpu_custom_call.1} parent=1 // pred_fallthru
      _
    // Predicated region
    $region26: #{tpu_custom_call.1} parent=1 // pred_check
      _
    $region27: #{tpu_custom_call.1} parent=1 // pred_check_branch
      %49 = sbr.rel (0) target = $region29
    $region28: #{tpu_custom_call.1} parent=1 // pred_region
      _
    $region29: #{tpu_custom_call.1} parent=1 // pred_fallthru
      _
    // Predicated region
    $region30: #{tpu_custom_call.1} parent=1 // pred_check
      _
    $region31: #{tpu_custom_call.1} parent=1 // pred_check_branch
      %51 = sbr.rel (0) target = $region33
    $region32: #{tpu_custom_call.1} parent=1 // pred_region
      _
    $region33: #{tpu_custom_call.1} parent=1 // pred_fallthru
      _
    // Predicated region
    $region34: #{tpu_custom_call.1} parent=1 // pred_check
      _
    $region35: #{tpu_custom_call.1} parent=1 // pred_check_branch
      %53 = sbr.rel (0) target = $region37
    $region36: #{tpu_custom_call.1} parent=1 // pred_region
      %54 = dma.done [#allocation3], 512
    $region37: #{tpu_custom_call.1} parent=1 // pred_fallthru
      _
    // Predicated region
    $region38: #{tpu_custom_call.1} parent=1 // pred_check
      _
    $region39: #{tpu_custom_call.1} parent=1 // pred_check_branch
      %56 = sbr.rel (0) target = $region41
    $region40: #{tpu_custom_call.1} parent=1 // pred_region
      %57 = dma.done [#allocation6], 2048
    $region41: #{tpu_custom_call.1} parent=1 // pred_fallthru
      _
    %v58 = vld [vmem:[%s0] sm:$0xff]
    %v59 = vld [vmem:[%s0 + $0x8] sm:$0xff]
    %v60 = vld [vmem:[%s0 + $0x10] sm:$0xff]
    %v61 = vld [vmem:[%s0 + $0x18] sm:$0xff]
    %v62 = vld [vmem:[#allocation2] sm:$0xff]
    %v63 = vld [vmem:[#allocation2 + $0x8] sm:$0xff]
    %v64 = vld [vmem:[#allocation2 + $0x10] sm:$0xff]
    %v65 = vld [vmem:[#allocation2 + $0x18] sm:$0xff]
    %v66 = vld [vmem:[%s2] sm:$0xff]
    %v67 = vld [vmem:[%s2 + $0x8] sm:$0xff]
    %v68 = vld [vmem:[%s2 + $0x10] sm:$0xff]
    %v69 = vld [vmem:[%s2 + $0x18] sm:$0xff]
    %v70 = vld [vmem:[%s2 + $0x20] sm:$0xff]
    %v71 = vld [vmem:[%s2 + $0x28] sm:$0xff]
    %v72 = vld [vmem:[%s2 + $0x30] sm:$0xff]
    %v73 = vld [vmem:[%s2 + $0x38] sm:$0xff]
    %v74 = vld [vmem:[%s2 + $0x40] sm:$0xff]
    %v75 = vld [vmem:[%s2 + $0x48] sm:$0xff]
    %v76 = vld [vmem:[%s2 + $0x50] sm:$0xff]
    %v77 = vld [vmem:[%s2 + $0x58] sm:$0xff]
    %v78 = vld [vmem:[%s2 + $0x60] sm:$0xff]
    %v79 = vld [vmem:[%s2 + $0x68] sm:$0xff]
    %v80 = vld [vmem:[%s2 + $0x70] sm:$0xff]
    %v81 = vld [vmem:[%s2 + $0x78] sm:$0xff]
    %vm82 = vcmask 130048
    %v84 = vsel %vm82, %v62, 0
    %86 = vmatprep.subr.mxu0 0.0
    %87 = vmatpush1.msra.mxu0 0.0
    %88 = vmatprep.subr.mxu0 0.0
    %89 = vmatpush1.msra.mxu0 0.0
    %90 = vmatprep.subr.mxu0 0.0
    %91 = vmatpush1.msra.mxu0 0.0
    %92 = vmatprep.subr.mxu0 0.0
    %93 = vmatpush1.msra.mxu0 0.0
    %94 = vmatprep.subr.mxu0 0.0
    %95 = vmatpush1.msra.mxu0 0.0
    %96 = vmatprep.subr.mxu0 0.0
    %97 = vmatpush1.msra.mxu0 0.0
    %98 = vmatprep.subr.mxu0 0.0
    %99 = vmatpush1.msra.mxu0 0.0
    %100 = vmatprep.subr.mxu0 0.0
    %101 = vmatpush1.msra.mxu0 0.0
    %102 = vmatprep.subr.mxu0 0.0
    %103 = vmatpush1.msra.mxu0 0.0
    %104 = vmatprep.subr.mxu0 0.0
    %105 = vmatpush1.msra.mxu0 0.0
    %106 = vmatprep.subr.mxu0 0.0
    %107 = vmatpush1.msra.mxu0 0.0
    %108 = vmatprep.subr.mxu0 0.0
    %109 = vmatpush1.msra.mxu0 0.0
    %110 = vmatprep.subr.mxu0 0.0
    %111 = vmatpush1.msra.mxu0 0.0
    %112 = vmatprep.subr.mxu0 0.0
    %113 = vmatpush1.msra.mxu0 0.0
    %114 = vmatprep.subr.mxu0 0.0
    %115 = vmatpush1.msra.mxu0 %v69
    %116 = vmatprep.subr.mxu0 0.0
    %117 = vmatpush1.msra.mxu0 %v68
    %118 = vmatprep.subr.mxu0 0.0
    %119 = vmatpush2.msra.mxu0 0.0
    %120 = vmatprep.subr.mxu0 0.0
    %121 = vmatpush2.msra.mxu0 0.0
    %122 = vmatprep.subr.mxu0 0.0
    %123 = vmatpush2.msra.mxu0 0.0
    %124 = vmatprep.subr.mxu0 0.0
    %125 = vmatpush2.msra.mxu0 0.0
    %126 = vmatprep.subr.mxu0 0.0
    %127 = vmatpush2.msra.mxu0 0.0
    %128 = vmatprep.subr.mxu0 0.0
    %129 = vmatpush2.msra.mxu0 0.0
    %130 = vmatprep.subr.mxu0 0.0
    %131 = vmatpush2.msra.mxu0 0.0
    %132 = vmatprep.subr.mxu0 0.0
    %133 = vmatpush2.msra.mxu0 0.0
    %134 = vmatprep.subr.mxu0 0.0
    %135 = vmatpush2.msra.mxu0 0.0
    %136 = vmatprep.subr.mxu0 0.0
    %137 = vmatpush2.msra.mxu0 0.0
    %138 = vmatprep.subr.mxu0 0.0
    %139 = vmatpush2.msra.mxu0 0.0
    %140 = vmatprep.subr.mxu0 0.0
    %141 = vmatpush2.msra.mxu0 0.0
    %142 = vmatprep.subr.mxu0 0.0
    %143 = vmatpush2.msra.mxu0 0.0
    %144 = vmatprep.subr.mxu0 0.0
    %145 = vmatpush2.msra.mxu0 0.0
    %146 = vmatprep.subr.mxu0 0.0
    %147 = vmatpush2.msra.mxu0 0.0
    %148 = vmatprep.subr.mxu0 0.0
    %149 = vmatpush2.msra.mxu0 0.0
    %150 = vmatprep.mubr.f32.mxu0 0.0
    %151 = vmatmul.mubr.f32.gmra.mxu0 %v84
    %v152 = vpop.f32.mrf.mxu0
    %v153 = vadd.f32 0.0, %v152
    %v154 = vpop.f32.mrf.mxu0
    %155 = vdwg.mxu0
    %v157 = vsel %vm82, %v63, 0
    %159 = vmatprep.subr.mxu0 0.0
    %160 = vmatpush1.msra.mxu0 0.0
    %161 = vmatprep.subr.mxu0 0.0
    %162 = vmatpush1.msra.mxu0 0.0
    %163 = vmatprep.subr.mxu0 0.0
    %164 = vmatpush1.msra.mxu0 0.0
    %165 = vmatprep.subr.mxu0 0.0
    %166 = vmatpush1.msra.mxu0 0.0
    %167 = vmatprep.subr.mxu0 0.0
    %168 = vmatpush1.msra.mxu0 0.0
    %169 = vmatprep.subr.mxu0 0.0
    %170 = vmatpush1.msra.mxu0 0.0
    %171 = vmatprep.subr.mxu0 0.0
    %172 = vmatpush1.msra.mxu0 0.0
    %173 = vmatprep.subr.mxu0 0.0
    %174 = vmatpush1.msra.mxu0 0.0
    %175 = vmatprep.subr.mxu0 0.0
    %176 = vmatpush1.msra.mxu0 0.0
    %177 = vmatprep.subr.mxu0 0.0
    %178 = vmatpush1.msra.mxu0 0.0
    %179 = vmatprep.subr.mxu0 0.0
    %180 = vmatpush1.msra.mxu0 0.0
    %181 = vmatprep.subr.mxu0 0.0
    %182 = vmatpush1.msra.mxu0 0.0
    %183 = vmatprep.subr.mxu0 0.0
    %184 = vmatpush1.msra.mxu0 0.0
    %185 = vmatprep.subr.mxu0 0.0
    %186 = vmatpush1.msra.mxu0 0.0
    %187 = vmatprep.subr.mxu0 0.0
    %188 = vmatpush1.msra.mxu0 %v73
    %189 = vmatprep.subr.mxu0 0.0
    %190 = vmatpush1.msra.mxu0 %v72
    %191 = vmatprep.subr.mxu0 0.0
    %192 = vmatpush2.msra.mxu0 0.0
    %193 = vmatprep.subr.mxu0 0.0
    %194 = vmatpush2.msra.mxu0 0.0
    %195 = vmatprep.subr.mxu0 0.0
    %196 = vmatpush2.msra.mxu0 0.0
    %197 = vmatprep.subr.mxu0 0.0
    %198 = vmatpush2.msra.mxu0 0.0
    %199 = vmatprep.subr.mxu0 0.0
    %200 = vmatpush2.msra.mxu0 0.0
    %201 = vmatprep.subr.mxu0 0.0
    %202 = vmatpush2.msra.mxu0 0.0
    %203 = vmatprep.subr.mxu0 0.0
    %204 = vmatpush2.msra.mxu0 0.0
    %205 = vmatprep.subr.mxu0 0.0
    %206 = vmatpush2.msra.mxu0 0.0
    %207 = vmatprep.subr.mxu0 0.0
    %208 = vmatpush2.msra.mxu0 0.0
    %209 = vmatprep.subr.mxu0 0.0
    %210 = vmatpush2.msra.mxu0 0.0
    %211 = vmatprep.subr.mxu0 0.0
    %212 = vmatpush2.msra.mxu0 0.0
    %213 = vmatprep.subr.mxu0 0.0
    %214 = vmatpush2.msra.mxu0 0.0
    %215 = vmatprep.subr.mxu0 0.0
    %216 = vmatpush2.msra.mxu0 0.0
    %217 = vmatprep.subr.mxu0 0.0
    %218 = vmatpush2.msra.mxu0 0.0
    %219 = vmatprep.subr.mxu0 0.0
    %220 = vmatpush2.msra.mxu0 0.0
    %221 = vmatprep.subr.mxu0 0.0
    %222 = vmatpush2.msra.mxu0 0.0
    %223 = vmatprep.mubr.f32.mxu0 0.0
    %224 = vmatmul.mubr.f32.gmra.mxu0 %v157
    %v225 = vpop.f32.mrf.mxu0
    %v226 = vadd.f32 0.0, %v225
    %v227 = vpop.f32.mrf.mxu0
    %228 = vdwg.mxu0
    %v230 = vsel %vm82, %v64, 0
    %232 = vmatprep.subr.mxu0 0.0
    %233 = vmatpush1.msra.mxu0 0.0
    %234 = vmatprep.subr.mxu0 0.0
    %235 = vmatpush1.msra.mxu0 0.0
    %236 = vmatprep.subr.mxu0 0.0
    %237 = vmatpush1.msra.mxu0 0.0
    %238 = vmatprep.subr.mxu0 0.0
    %239 = vmatpush1.msra.mxu0 0.0
    %240 = vmatprep.subr.mxu0 0.0
    %241 = vmatpush1.msra.mxu0 0.0
    %242 = vmatprep.subr.mxu0 0.0
    %243 = vmatpush1.msra.mxu0 0.0
    %244 = vmatprep.subr.mxu0 0.0
    %245 = vmatpush1.msra.mxu0 0.0
    %246 = vmatprep.subr.mxu0 0.0
    %247 = vmatpush1.msra.mxu0 0.0
    %248 = vmatprep.subr.mxu0 0.0
    %249 = vmatpush1.msra.mxu0 0.0
    %250 = vmatprep.subr.mxu0 0.0
    %251 = vmatpush1.msra.mxu0 0.0
    %252 = vmatprep.subr.mxu0 0.0
    %253 = vmatpush1.msra.mxu0 0.0
    %254 = vmatprep.subr.mxu0 0.0
    %255 = vmatpush1.msra.mxu0 0.0
    %256 = vmatprep.subr.mxu0 0.0
    %257 = vmatpush1.msra.mxu0 0.0
    %258 = vmatprep.subr.mxu0 0.0
    %259 = vmatpush1.msra.mxu0 0.0
    %260 = vmatprep.subr.mxu0 0.0
    %261 = vmatpush1.msra.mxu0 %v77
    %262 = vmatprep.subr.mxu0 0.0
    %263 = vmatpush1.msra.mxu0 %v76
    %264 = vmatprep.subr.mxu0 0.0
    %265 = vmatpush2.msra.mxu0 0.0
    %266 = vmatprep.subr.mxu0 0.0
    %267 = vmatpush2.msra.mxu0 0.0
    %268 = vmatprep.subr.mxu0 0.0
    %269 = vmatpush2.msra.mxu0 0.0
    %270 = vmatprep.subr.mxu0 0.0
    %271 = vmatpush2.msra.mxu0 0.0
    %272 = vmatprep.subr.mxu0 0.0
    %273 = vmatpush2.msra.mxu0 0.0
    %274 = vmatprep.subr.mxu0 0.0
    %275 = vmatpush2.msra.mxu0 0.0
    %276 = vmatprep.subr.mxu0 0.0
    %277 = vmatpush2.msra.mxu0 0.0
    %278 = vmatprep.subr.mxu0 0.0
    %279 = vmatpush2.msra.mxu0 0.0
    %280 = vmatprep.subr.mxu0 0.0
    %281 = vmatpush2.msra.mxu0 0.0
    %282 = vmatprep.subr.mxu0 0.0
    %283 = vmatpush2.msra.mxu0 0.0
    %284 = vmatprep.subr.mxu0 0.0
    %285 = vmatpush2.msra.mxu0 0.0
    %286 = vmatprep.subr.mxu0 0.0
    %287 = vmatpush2.msra.mxu0 0.0
    %288 = vmatprep.subr.mxu0 0.0
    %289 = vmatpush2.msra.mxu0 0.0
    %290 = vmatprep.subr.mxu0 0.0
    %291 = vmatpush2.msra.mxu0 0.0
    %292 = vmatprep.subr.mxu0 0.0
    %293 = vmatpush2.msra.mxu0 0.0
    %294 = vmatprep.subr.mxu0 0.0
    %295 = vmatpush2.msra.mxu0 0.0
    %296 = vmatprep.mubr.f32.mxu0 0.0
    %297 = vmatmul.mubr.f32.gmra.mxu0 %v230
    %v298 = vpop.f32.mrf.mxu0
    %v299 = vadd.f32 0.0, %v298
    %v300 = vpop.f32.mrf.mxu0
    %301 = vdwg.mxu0
    %v303 = vsel %vm82, %v65, 0
    %305 = vmatprep.subr.mxu0 0.0
    %306 = vmatpush1.msra.mxu0 0.0
    %307 = vmatprep.subr.mxu0 0.0
    %308 = vmatpush1.msra.mxu0 0.0
    %309 = vmatprep.subr.mxu0 0.0
    %310 = vmatpush1.msra.mxu0 0.0
    %311 = vmatprep.subr.mxu0 0.0
    %312 = vmatpush1.msra.mxu0 0.0
    %313 = vmatprep.subr.mxu0 0.0
    %314 = vmatpush1.msra.mxu0 0.0
    %315 = vmatprep.subr.mxu0 0.0
    %316 = vmatpush1.msra.mxu0 0.0
    %317 = vmatprep.subr.mxu0 0.0
    %318 = vmatpush1.msra.mxu0 0.0
    %319 = vmatprep.subr.mxu0 0.0
    %320 = vmatpush1.msra.mxu0 0.0
    %321 = vmatprep.subr.mxu0 0.0
    %322 = vmatpush1.msra.mxu0 0.0
    %323 = vmatprep.subr.mxu0 0.0
    %324 = vmatpush1.msra.mxu0 0.0
    %325 = vmatprep.subr.mxu0 0.0
    %326 = vmatpush1.msra.mxu0 0.0
    %327 = vmatprep.subr.mxu0 0.0
    %328 = vmatpush1.msra.mxu0 0.0
    %329 = vmatprep.subr.mxu0 0.0
    %330 = vmatpush1.msra.mxu0 0.0
    %331 = vmatprep.subr.mxu0 0.0
    %332 = vmatpush1.msra.mxu0 0.0
    %333 = vmatprep.subr.mxu0 0.0
    %334 = vmatpush1.msra.mxu0 %v81
    %335 = vmatprep.subr.mxu0 0.0
    %336 = vmatpush1.msra.mxu0 %v80
    %337 = vmatprep.subr.mxu0 0.0
    %338 = vmatpush2.msra.mxu0 0.0
    %339 = vmatprep.subr.mxu0 0.0
    %340 = vmatpush2.msra.mxu0 0.0
    %341 = vmatprep.subr.mxu0 0.0
    %342 = vmatpush2.msra.mxu0 0.0
    %343 = vmatprep.subr.mxu0 0.0
    %344 = vmatpush2.msra.mxu0 0.0
    %345 = vmatprep.subr.mxu0 0.0
    %346 = vmatpush2.msra.mxu0 0.0
    %347 = vmatprep.subr.mxu0 0.0
    %348 = vmatpush2.msra.mxu0 0.0
    %349 = vmatprep.subr.mxu0 0.0
    %350 = vmatpush2.msra.mxu0 0.0
    %351 = vmatprep.subr.mxu0 0.0
    %352 = vmatpush2.msra.mxu0 0.0
    %353 = vmatprep.subr.mxu0 0.0
    %354 = vmatpush2.msra.mxu0 0.0
    %355 = vmatprep.subr.mxu0 0.0
    %356 = vmatpush2.msra.mxu0 0.0
    %357 = vmatprep.subr.mxu0 0.0
    %358 = vmatpush2.msra.mxu0 0.0
    %359 = vmatprep.subr.mxu0 0.0
    %360 = vmatpush2.msra.mxu0 0.0
    %361 = vmatprep.subr.mxu0 0.0
    %362 = vmatpush2.msra.mxu0 0.0
    %363 = vmatprep.subr.mxu0 0.0
    %364 = vmatpush2.msra.mxu0 0.0
    %365 = vmatprep.subr.mxu0 0.0
    %366 = vmatpush2.msra.mxu0 0.0
    %367 = vmatprep.subr.mxu0 0.0
    %368 = vmatpush2.msra.mxu0 0.0
    %369 = vmatprep.mubr.f32.mxu0 0.0
    %370 = vmatmul.mubr.f32.gmra.mxu0 %v303
    %v371 = vpop.f32.mrf.mxu0
    %v372 = vadd.f32 0.0, %v371
    %v373 = vpop.f32.mrf.mxu0
    %374 = vdwg.mxu0
    %v376 = vsel %vm82, %v58, 0
    %378 = vmatprep.subr.mxu0 0.0
    %379 = vmatpush1.msra.mxu0 0.0
    %380 = vmatprep.subr.mxu0 0.0
    %381 = vmatpush1.msra.mxu0 0.0
    %382 = vmatprep.subr.mxu0 0.0
    %383 = vmatpush1.msra.mxu0 0.0
    %384 = vmatprep.subr.mxu0 0.0
    %385 = vmatpush1.msra.mxu0 0.0
    %386 = vmatprep.subr.mxu0 0.0
    %387 = vmatpush1.msra.mxu0 0.0
    %388 = vmatprep.subr.mxu0 0.0
    %389 = vmatpush1.msra.mxu0 0.0
    %390 = vmatprep.subr.mxu0 0.0
    %391 = vmatpush1.msra.mxu0 0.0
    %392 = vmatprep.subr.mxu0 0.0
    %393 = vmatpush1.msra.mxu0 0.0
    %394 = vmatprep.subr.mxu0 0.0
    %395 = vmatpush1.msra.mxu0 0.0
    %396 = vmatprep.subr.mxu0 0.0
    %397 = vmatpush1.msra.mxu0 0.0
    %398 = vmatprep.subr.mxu0 0.0
    %399 = vmatpush1.msra.mxu0 0.0
    %400 = vmatprep.subr.mxu0 0.0
    %401 = vmatpush1.msra.mxu0 0.0
    %402 = vmatprep.subr.mxu0 0.0
    %403 = vmatpush1.msra.mxu0 0.0
    %404 = vmatprep.subr.mxu0 0.0
    %405 = vmatpush1.msra.mxu0 0.0
    %406 = vmatprep.subr.mxu0 0.0
    %407 = vmatpush1.msra.mxu0 %v67
    %408 = vmatprep.subr.mxu0 0.0
    %409 = vmatpush1.msra.mxu0 %v66
    %410 = vmatprep.subr.mxu0 0.0
    %411 = vmatpush2.msra.mxu0 0.0
    %412 = vmatprep.subr.mxu0 0.0
    %413 = vmatpush2.msra.mxu0 0.0
    %414 = vmatprep.subr.mxu0 0.0
    %415 = vmatpush2.msra.mxu0 0.0
    %416 = vmatprep.subr.mxu0 0.0
    %417 = vmatpush2.msra.mxu0 0.0
    %418 = vmatprep.subr.mxu0 0.0
    %419 = vmatpush2.msra.mxu0 0.0
    %420 = vmatprep.subr.mxu0 0.0
    %421 = vmatpush2.msra.mxu0 0.0
    %422 = vmatprep.subr.mxu0 0.0
    %423 = vmatpush2.msra.mxu0 0.0
    %424 = vmatprep.subr.mxu0 0.0
    %425 = vmatpush2.msra.mxu0 0.0
    %426 = vmatprep.subr.mxu0 0.0
    %427 = vmatpush2.msra.mxu0 0.0
    %428 = vmatprep.subr.mxu0 0.0
    %429 = vmatpush2.msra.mxu0 0.0
    %430 = vmatprep.subr.mxu0 0.0
    %431 = vmatpush2.msra.mxu0 0.0
    %432 = vmatprep.subr.mxu0 0.0
    %433 = vmatpush2.msra.mxu0 0.0
    %434 = vmatprep.subr.mxu0 0.0
    %435 = vmatpush2.msra.mxu0 0.0
    %436 = vmatprep.subr.mxu0 0.0
    %437 = vmatpush2.msra.mxu0 0.0
    %438 = vmatprep.subr.mxu0 0.0
    %439 = vmatpush2.msra.mxu0 0.0
    %440 = vmatprep.subr.mxu0 0.0
    %441 = vmatpush2.msra.mxu0 0.0
    %442 = vmatprep.mubr.f32.mxu0 0.0
    %443 = vmatmul.mubr.f32.gmra.mxu0 %v376
    %v444 = vpop.f32.mrf.mxu0
    %v445 = vadd.f32 %v153, %v444
    %v446 = vpop.f32.mrf.mxu0
    %447 = vdwg.mxu0
    %v449 = vsel %vm82, %v59, 0
    %451 = vmatprep.subr.mxu0 0.0
    %452 = vmatpush1.msra.mxu0 0.0
    %453 = vmatprep.subr.mxu0 0.0
    %454 = vmatpush1.msra.mxu0 0.0
    %455 = vmatprep.subr.mxu0 0.0
    %456 = vmatpush1.msra.mxu0 0.0
    %457 = vmatprep.subr.mxu0 0.0
    %458 = vmatpush1.msra.mxu0 0.0
    %459 = vmatprep.subr.mxu0 0.0
    %460 = vmatpush1.msra.mxu0 0.0
    %461 = vmatprep.subr.mxu0 0.0
    %462 = vmatpush1.msra.mxu0 0.0
    %463 = vmatprep.subr.mxu0 0.0
    %464 = vmatpush1.msra.mxu0 0.0
    %465 = vmatprep.subr.mxu0 0.0
    %466 = vmatpush1.msra.mxu0 0.0
    %467 = vmatprep.subr.mxu0 0.0
    %468 = vmatpush1.msra.mxu0 0.0
    %469 = vmatprep.subr.mxu0 0.0
    %470 = vmatpush1.msra.mxu0 0.0
    %471 = vmatprep.subr.mxu0 0.0
    %472 = vmatpush1.msra.mxu0 0.0
    %473 = vmatprep.subr.mxu0 0.0
    %474 = vmatpush1.msra.mxu0 0.0
    %475 = vmatprep.subr.mxu0 0.0
    %476 = vmatpush1.msra.mxu0 0.0
    %477 = vmatprep.subr.mxu0 0.0
    %478 = vmatpush1.msra.mxu0 0.0
    %479 = vmatprep.subr.mxu0 0.0
    %480 = vmatpush1.msra.mxu0 %v71
    %481 = vmatprep.subr.mxu0 0.0
    %482 = vmatpush1.msra.mxu0 %v70
    %483 = vmatprep.subr.mxu0 0.0
    %484 = vmatpush2.msra.mxu0 0.0
    %485 = vmatprep.subr.mxu0 0.0
    %486 = vmatpush2.msra.mxu0 0.0
    %487 = vmatprep.subr.mxu0 0.0
    %488 = vmatpush2.msra.mxu0 0.0
    %489 = vmatprep.subr.mxu0 0.0
    %490 = vmatpush2.msra.mxu0 0.0
    %491 = vmatprep.subr.mxu0 0.0
    %492 = vmatpush2.msra.mxu0 0.0
    %493 = vmatprep.subr.mxu0 0.0
    %494 = vmatpush2.msra.mxu0 0.0
    %495 = vmatprep.subr.mxu0 0.0
    %496 = vmatpush2.msra.mxu0 0.0
    %497 = vmatprep.subr.mxu0 0.0
    %498 = vmatpush2.msra.mxu0 0.0
    %499 = vmatprep.subr.mxu0 0.0
    %500 = vmatpush2.msra.mxu0 0.0
    %501 = vmatprep.subr.mxu0 0.0
    %502 = vmatpush2.msra.mxu0 0.0
    %503 = vmatprep.subr.mxu0 0.0
    %504 = vmatpush2.msra.mxu0 0.0
    %505 = vmatprep.subr.mxu0 0.0
    %506 = vmatpush2.msra.mxu0 0.0
    %507 = vmatprep.subr.mxu0 0.0
    %508 = vmatpush2.msra.mxu0 0.0
    %509 = vmatprep.subr.mxu0 0.0
    %510 = vmatpush2.msra.mxu0 0.0
    %511 = vmatprep.subr.mxu0 0.0
    %512 = vmatpush2.msra.mxu0 0.0
    %513 = vmatprep.subr.mxu0 0.0
    %514 = vmatpush2.msra.mxu0 0.0
    %515 = vmatprep.mubr.f32.mxu0 0.0
    %516 = vmatmul.mubr.f32.gmra.mxu0 %v449
    %v517 = vpop.f32.mrf.mxu0
    %v518 = vadd.f32 %v226, %v517
    %v519 = vpop.f32.mrf.mxu0
    %520 = vdwg.mxu0
    %v522 = vsel %vm82, %v60, 0
    %524 = vmatprep.subr.mxu0 0.0
    %525 = vmatpush1.msra.mxu0 0.0
    %526 = vmatprep.subr.mxu0 0.0
    %527 = vmatpush1.msra.mxu0 0.0
    %528 = vmatprep.subr.mxu0 0.0
    %529 = vmatpush1.msra.mxu0 0.0
    %530 = vmatprep.subr.mxu0 0.0
    %531 = vmatpush1.msra.mxu0 0.0
    %532 = vmatprep.subr.mxu0 0.0
    %533 = vmatpush1.msra.mxu0 0.0
    %534 = vmatprep.subr.mxu0 0.0
    %535 = vmatpush1.msra.mxu0 0.0
    %536 = vmatprep.subr.mxu0 0.0
    %537 = vmatpush1.msra.mxu0 0.0
    %538 = vmatprep.subr.mxu0 0.0
    %539 = vmatpush1.msra.mxu0 0.0
    %540 = vmatprep.subr.mxu0 0.0
    %541 = vmatpush1.msra.mxu0 0.0
    %542 = vmatprep.subr.mxu0 0.0
    %543 = vmatpush1.msra.mxu0 0.0
    %544 = vmatprep.subr.mxu0 0.0
    %545 = vmatpush1.msra.mxu0 0.0
    %546 = vmatprep.subr.mxu0 0.0
    %547 = vmatpush1.msra.mxu0 0.0
    %548 = vmatprep.subr.mxu0 0.0
    %549 = vmatpush1.msra.mxu0 0.0
    %550 = vmatprep.subr.mxu0 0.0
    %551 = vmatpush1.msra.mxu0 0.0
    %552 = vmatprep.subr.mxu0 0.0
    %553 = vmatpush1.msra.mxu0 %v75
    %554 = vmatprep.subr.mxu0 0.0
    %555 = vmatpush1.msra.mxu0 %v74
    %556 = vmatprep.subr.mxu0 0.0
    %557 = vmatpush2.msra.mxu0 0.0
    %558 = vmatprep.subr.mxu0 0.0
    %559 = vmatpush2.msra.mxu0 0.0
    %560 = vmatprep.subr.mxu0 0.0
    %561 = vmatpush2.msra.mxu0 0.0
    %562 = vmatprep.subr.mxu0 0.0
    %563 = vmatpush2.msra.mxu0 0.0
    %564 = vmatprep.subr.mxu0 0.0
    %565 = vmatpush2.msra.mxu0 0.0
    %566 = vmatprep.subr.mxu0 0.0
    %567 = vmatpush2.msra.mxu0 0.0
    %568 = vmatprep.subr.mxu0 0.0
    %569 = vmatpush2.msra.mxu0 0.0
    %570 = vmatprep.subr.mxu0 0.0
    %571 = vmatpush2.msra.mxu0 0.0
    %572 = vmatprep.subr.mxu0 0.0
    %573 = vmatpush2.msra.mxu0 0.0
    %574 = vmatprep.subr.mxu0 0.0
    %575 = vmatpush2.msra.mxu0 0.0
    %576 = vmatprep.subr.mxu0 0.0
    %577 = vmatpush2.msra.mxu0 0.0
    %578 = vmatprep.subr.mxu0 0.0
    %579 = vmatpush2.msra.mxu0 0.0
    %580 = vmatprep.subr.mxu0 0.0
    %581 = vmatpush2.msra.mxu0 0.0
    %582 = vmatprep.subr.mxu0 0.0
    %583 = vmatpush2.msra.mxu0 0.0
    %584 = vmatprep.subr.mxu0 0.0
    %585 = vmatpush2.msra.mxu0 0.0
    %586 = vmatprep.subr.mxu0 0.0
    %587 = vmatpush2.msra.mxu0 0.0
    %588 = vmatprep.mubr.f32.mxu0 0.0
    %589 = vmatmul.mubr.f32.gmra.mxu0 %v522
    %v590 = vpop.f32.mrf.mxu0
    %v591 = vadd.f32 %v299, %v590
    %v592 = vpop.f32.mrf.mxu0
    %593 = vdwg.mxu0
    %v595 = vsel %vm82, %v61, 0
    %597 = vmatprep.subr.mxu0 0.0
    %598 = vmatpush1.msra.mxu0 0.0
    %599 = vmatprep.subr.mxu0 0.0
    %600 = vmatpush1.msra.mxu0 0.0
    %601 = vmatprep.subr.mxu0 0.0
    %602 = vmatpush1.msra.mxu0 0.0
    %603 = vmatprep.subr.mxu0 0.0
    %604 = vmatpush1.msra.mxu0 0.0
    %605 = vmatprep.subr.mxu0 0.0
    %606 = vmatpush1.msra.mxu0 0.0
    %607 = vmatprep.subr.mxu0 0.0
    %608 = vmatpush1.msra.mxu0 0.0
    %609 = vmatprep.subr.mxu0 0.0
    %610 = vmatpush1.msra.mxu0 0.0
    %611 = vmatprep.subr.mxu0 0.0
    %612 = vmatpush1.msra.mxu0 0.0
    %613 = vmatprep.subr.mxu0 0.0
    %614 = vmatpush1.msra.mxu0 0.0
    %615 = vmatprep.subr.mxu0 0.0
    %616 = vmatpush1.msra.mxu0 0.0
    %617 = vmatprep.subr.mxu0 0.0
    %618 = vmatpush1.msra.mxu0 0.0
    %619 = vmatprep.subr.mxu0 0.0
    %620 = vmatpush1.msra.mxu0 0.0
    %621 = vmatprep.subr.mxu0 0.0
    %622 = vmatpush1.msra.mxu0 0.0
    %623 = vmatprep.subr.mxu0 0.0
    %624 = vmatpush1.msra.mxu0 0.0
    %625 = vmatprep.subr.mxu0 0.0
    %626 = vmatpush1.msra.mxu0 %v79
    %627 = vmatprep.subr.mxu0 0.0
    %628 = vmatpush1.msra.mxu0 %v78
    %629 = vmatprep.subr.mxu0 0.0
    %630 = vmatpush2.msra.mxu0 0.0
    %631 = vmatprep.subr.mxu0 0.0
    %632 = vmatpush2.msra.mxu0 0.0
    %633 = vmatprep.subr.mxu0 0.0
    %634 = vmatpush2.msra.mxu0 0.0
    %635 = vmatprep.subr.mxu0 0.0
    %636 = vmatpush2.msra.mxu0 0.0
    %637 = vmatprep.subr.mxu0 0.0
    %638 = vmatpush2.msra.mxu0 0.0
    %639 = vmatprep.subr.mxu0 0.0
    %640 = vmatpush2.msra.mxu0 0.0
    %641 = vmatprep.subr.mxu0 0.0
    %642 = vmatpush2.msra.mxu0 0.0
    %643 = vmatprep.subr.mxu0 0.0
    %644 = vmatpush2.msra.mxu0 0.0
    %645 = vmatprep.subr.mxu0 0.0
    %646 = vmatpush2.msra.mxu0 0.0
    %647 = vmatprep.subr.mxu0 0.0
    %648 = vmatpush2.msra.mxu0 0.0
    %649 = vmatprep.subr.mxu0 0.0
    %650 = vmatpush2.msra.mxu0 0.0
    %651 = vmatprep.subr.mxu0 0.0
    %652 = vmatpush2.msra.mxu0 0.0
    %653 = vmatprep.subr.mxu0 0.0
    %654 = vmatpush2.msra.mxu0 0.0
    %655 = vmatprep.subr.mxu0 0.0
    %656 = vmatpush2.msra.mxu0 0.0
    %657 = vmatprep.subr.mxu0 0.0
    %658 = vmatpush2.msra.mxu0 0.0
    %659 = vmatprep.subr.mxu0 0.0
    %660 = vmatpush2.msra.mxu0 0.0
    %661 = vmatprep.mubr.f32.mxu0 0.0
    %662 = vmatmul.mubr.f32.gmra.mxu0 %v595
    %v663 = vpop.f32.mrf.mxu0
    %v664 = vadd.f32 %v372, %v663
    %v665 = vpop.f32.mrf.mxu0
    %666 = vdwg.mxu0
    %v667 = vld [vmem:[%s3] sm:$0x1]
    %v668 = vld [vmem:[%s3 + $0x1] sm:$0x1]
    %v669 = vld [vmem:[%s3 + $0x2] sm:$0x1]
    %v670 = vld [vmem:[%s3 + $0x3] sm:$0x1]
    %v675 = vlaneseq
    %v676 = vshrl.u32 %v675, 7
    %v677 = vsub.s32 0, %v676
    %v678 = vrot.slane %v667, %v677
    %v679 = vlaneseq
    %v680 = vshrl.u32 %v679, 7
    %v681 = vsub.s32 0, %v680
    %v682 = vrot.slane %v668, %v681
    %v683 = vlaneseq
    %v684 = vshrl.u32 %v683, 7
    %v685 = vsub.s32 0, %v684
    %v686 = vrot.slane %v669, %v685
    %v687 = vlaneseq
    %v688 = vshrl.u32 %v687, 7
    %v689 = vsub.s32 0, %v688
    %v690 = vrot.slane %v670, %v689
    %v695 = vadd.f32 %v445, %v678
    %v696 = vadd.f32 %v518, %v682
    %v697 = vadd.f32 %v591, %v686
    %v698 = vadd.f32 %v664, %v690
    %v699 = vmax.f32 %v695, 0.0
    %v700 = vmax.f32 %v696, 0.0
    %v701 = vmax.f32 %v697, 0.0
    %v702 = vmax.f32 %v698, 0.0
    %v703 = vld [vmem:[#allocation5] sm:$0xff]
    %v704 = vld [vmem:[#allocation5 + $0x8] sm:$0xff]
    %v705 = vld [vmem:[#allocation5 + $0x10] sm:$0xff]
    %v706 = vld [vmem:[#allocation5 + $0x18] sm:$0xff]
    %v707 = vld [vmem:[#allocation5 + $0x20] sm:$0xff]
    %v708 = vld [vmem:[#allocation5 + $0x28] sm:$0xff]
    %v709 = vld [vmem:[#allocation5 + $0x30] sm:$0xff]
    %v710 = vld [vmem:[#allocation5 + $0x38] sm:$0xff]
    %v711 = vld [vmem:[#allocation5 + $0x40] sm:$0xff]
    %v712 = vld [vmem:[#allocation5 + $0x48] sm:$0xff]
    %v713 = vld [vmem:[#allocation5 + $0x50] sm:$0xff]
    %v714 = vld [vmem:[#allocation5 + $0x58] sm:$0xff]
    %v715 = vld [vmem:[#allocation5 + $0x60] sm:$0xff]
    %v716 = vld [vmem:[#allocation5 + $0x68] sm:$0xff]
    %v717 = vld [vmem:[#allocation5 + $0x70] sm:$0xff]
    %v718 = vld [vmem:[#allocation5 + $0x78] sm:$0xff]
    %v719 = vld [vmem:[%s5] sm:$0x1]
    %v720 = vld [vmem:[%s5 + $0x1] sm:$0x1]
    %v721 = vld [vmem:[%s5 + $0x2] sm:$0x1]
    %v722 = vld [vmem:[%s5 + $0x3] sm:$0x1]
    %v727 = vlaneseq
    %v728 = vshrl.u32 %v727, 7
    %v729 = vsub.s32 0, %v728
    %v730 = vrot.slane %v719, %v729
    %v731 = vlaneseq
    %v732 = vshrl.u32 %v731, 7
    %v733 = vsub.s32 0, %v732
    %v734 = vrot.slane %v720, %v733
    %v735 = vlaneseq
    %v736 = vshrl.u32 %v735, 7
    %v737 = vsub.s32 0, %v736
    %v738 = vrot.slane %v721, %v737
    %v739 = vlaneseq
    %v740 = vshrl.u32 %v739, 7
    %v741 = vsub.s32 0, %v740
    %v742 = vrot.slane %v722, %v741
    %vm747 = vcmask 261120
    %v749 = vsel %vm747, %v699, 0
    %751 = vmatprep.subr.mxu0 0.0
    %752 = vmatpush1.msra.mxu0 0.0
    %753 = vmatprep.subr.mxu0 0.0
    %754 = vmatpush1.msra.mxu0 0.0
    %755 = vmatprep.subr.mxu0 0.0
    %756 = vmatpush1.msra.mxu0 0.0
    %757 = vmatprep.subr.mxu0 0.0
    %758 = vmatpush1.msra.mxu0 0.0
    %759 = vmatprep.subr.mxu0 0.0
    %760 = vmatpush1.msra.mxu0 0.0
    %761 = vmatprep.subr.mxu0 0.0
    %762 = vmatpush1.msra.mxu0 0.0
    %763 = vmatprep.subr.mxu0 0.0
    %764 = vmatpush1.msra.mxu0 0.0
    %765 = vmatprep.subr.mxu0 0.0
    %766 = vmatpush1.msra.mxu0 0.0
    %767 = vmatprep.subr.mxu0 0.0
    %768 = vmatpush1.msra.mxu0 0.0
    %769 = vmatprep.subr.mxu0 0.0
    %770 = vmatpush1.msra.mxu0 0.0
    %771 = vmatprep.subr.mxu0 0.0
    %772 = vmatpush1.msra.mxu0 0.0
    %773 = vmatprep.subr.mxu0 0.0
    %774 = vmatpush1.msra.mxu0 0.0
    %775 = vmatprep.subr.mxu0 0.0
    %776 = vmatpush1.msra.mxu0 %v706
    %777 = vmatprep.subr.mxu0 0.0
    %778 = vmatpush1.msra.mxu0 %v705
    %779 = vmatprep.subr.mxu0 0.0
    %780 = vmatpush1.msra.mxu0 %v704
    %781 = vmatprep.subr.mxu0 0.0
    %782 = vmatpush1.msra.mxu0 %v703
    %783 = vmatprep.subr.mxu0 0.0
    %784 = vmatpush2.msra.mxu0 0.0
    %785 = vmatprep.subr.mxu0 0.0
    %786 = vmatpush2.msra.mxu0 0.0
    %787 = vmatprep.subr.mxu0 0.0
    %788 = vmatpush2.msra.mxu0 0.0
    %789 = vmatprep.subr.mxu0 0.0
    %790 = vmatpush2.msra.mxu0 0.0
    %791 = vmatprep.subr.mxu0 0.0
    %792 = vmatpush2.msra.mxu0 0.0
    %793 = vmatprep.subr.mxu0 0.0
    %794 = vmatpush2.msra.mxu0 0.0
    %795 = vmatprep.subr.mxu0 0.0
    %796 = vmatpush2.msra.mxu0 0.0
    %797 = vmatprep.subr.mxu0 0.0
    %798 = vmatpush2.msra.mxu0 0.0
    %799 = vmatprep.subr.mxu0 0.0
    %800 = vmatpush2.msra.mxu0 0.0
    %801 = vmatprep.subr.mxu0 0.0
    %802 = vmatpush2.msra.mxu0 0.0
    %803 = vmatprep.subr.mxu0 0.0
    %804 = vmatpush2.msra.mxu0 0.0
    %805 = vmatprep.subr.mxu0 0.0
    %806 = vmatpush2.msra.mxu0 0.0
    %807 = vmatprep.subr.mxu0 0.0
    %808 = vmatpush2.msra.mxu0 0.0
    %809 = vmatprep.subr.mxu0 0.0
    %810 = vmatpush2.msra.mxu0 0.0
    %811 = vmatprep.subr.mxu0 0.0
    %812 = vmatpush2.msra.mxu0 0.0
    %813 = vmatprep.subr.mxu0 0.0
    %814 = vmatpush2.msra.mxu0 0.0
    %815 = vmatprep.mubr.f32.mxu0 0.0
    %816 = vmatmul.mubr.f32.gmra.mxu0 %v749
    %v817 = vpop.f32.mrf.mxu0
    %v818 = vadd.f32 %v730, %v817
    %v819 = vpop.f32.mrf.mxu0
    %820 = vdwg.mxu0
    %v822 = vsel %vm747, %v700, 0
    %824 = vmatprep.subr.mxu0 0.0
    %825 = vmatpush1.msra.mxu0 0.0
    %826 = vmatprep.subr.mxu0 0.0
    %827 = vmatpush1.msra.mxu0 0.0
    %828 = vmatprep.subr.mxu0 0.0
    %829 = vmatpush1.msra.mxu0 0.0
    %830 = vmatprep.subr.mxu0 0.0
    %831 = vmatpush1.msra.mxu0 0.0
    %832 = vmatprep.subr.mxu0 0.0
    %833 = vmatpush1.msra.mxu0 0.0
    %834 = vmatprep.subr.mxu0 0.0
    %835 = vmatpush1.msra.mxu0 0.0
    %836 = vmatprep.subr.mxu0 0.0
    %837 = vmatpush1.msra.mxu0 0.0
    %838 = vmatprep.subr.mxu0 0.0
    %839 = vmatpush1.msra.mxu0 0.0
    %840 = vmatprep.subr.mxu0 0.0
    %841 = vmatpush1.msra.mxu0 0.0
    %842 = vmatprep.subr.mxu0 0.0
    %843 = vmatpush1.msra.mxu0 0.0
    %844 = vmatprep.subr.mxu0 0.0
    %845 = vmatpush1.msra.mxu0 0.0
    %846 = vmatprep.subr.mxu0 0.0
    %847 = vmatpush1.msra.mxu0 0.0
    %848 = vmatprep.subr.mxu0 0.0
    %849 = vmatpush1.msra.mxu0 %v710
    %850 = vmatprep.subr.mxu0 0.0
    %851 = vmatpush1.msra.mxu0 %v709
    %852 = vmatprep.subr.mxu0 0.0
    %853 = vmatpush1.msra.mxu0 %v708
    %854 = vmatprep.subr.mxu0 0.0
    %855 = vmatpush1.msra.mxu0 %v707
    %856 = vmatprep.subr.mxu0 0.0
    %857 = vmatpush2.msra.mxu0 0.0
    %858 = vmatprep.subr.mxu0 0.0
    %859 = vmatpush2.msra.mxu0 0.0
    %860 = vmatprep.subr.mxu0 0.0
    %861 = vmatpush2.msra.mxu0 0.0
    %862 = vmatprep.subr.mxu0 0.0
    %863 = vmatpush2.msra.mxu0 0.0
    %864 = vmatprep.subr.mxu0 0.0
    %865 = vmatpush2.msra.mxu0 0.0
    %866 = vmatprep.subr.mxu0 0.0
    %867 = vmatpush2.msra.mxu0 0.0
    %868 = vmatprep.subr.mxu0 0.0
    %869 = vmatpush2.msra.mxu0 0.0
    %870 = vmatprep.subr.mxu0 0.0
    %871 = vmatpush2.msra.mxu0 0.0
    %872 = vmatprep.subr.mxu0 0.0
    %873 = vmatpush2.msra.mxu0 0.0
    %874 = vmatprep.subr.mxu0 0.0
    %875 = vmatpush2.msra.mxu0 0.0
    %876 = vmatprep.subr.mxu0 0.0
    %877 = vmatpush2.msra.mxu0 0.0
    %878 = vmatprep.subr.mxu0 0.0
    %879 = vmatpush2.msra.mxu0 0.0
    %880 = vmatprep.subr.mxu0 0.0
    %881 = vmatpush2.msra.mxu0 0.0
    %882 = vmatprep.subr.mxu0 0.0
    %883 = vmatpush2.msra.mxu0 0.0
    %884 = vmatprep.subr.mxu0 0.0
    %885 = vmatpush2.msra.mxu0 0.0
    %886 = vmatprep.subr.mxu0 0.0
    %887 = vmatpush2.msra.mxu0 0.0
    %888 = vmatprep.mubr.f32.mxu0 0.0
    %889 = vmatmul.mubr.f32.gmra.mxu0 %v822
    %v890 = vpop.f32.mrf.mxu0
    %v891 = vadd.f32 %v734, %v890
    %v892 = vpop.f32.mrf.mxu0
    %893 = vdwg.mxu0
    %v895 = vsel %vm747, %v701, 0
    %897 = vmatprep.subr.mxu0 0.0
    %898 = vmatpush1.msra.mxu0 0.0
    %899 = vmatprep.subr.mxu0 0.0
    %900 = vmatpush1.msra.mxu0 0.0
    %901 = vmatprep.subr.mxu0 0.0
    %902 = vmatpush1.msra.mxu0 0.0
    %903 = vmatprep.subr.mxu0 0.0
    %904 = vmatpush1.msra.mxu0 0.0
    %905 = vmatprep.subr.mxu0 0.0
    %906 = vmatpush1.msra.mxu0 0.0
    %907 = vmatprep.subr.mxu0 0.0
    %908 = vmatpush1.msra.mxu0 0.0
    %909 = vmatprep.subr.mxu0 0.0
    %910 = vmatpush1.msra.mxu0 0.0
    %911 = vmatprep.subr.mxu0 0.0
    %912 = vmatpush1.msra.mxu0 0.0
    %913 = vmatprep.subr.mxu0 0.0
    %914 = vmatpush1.msra.mxu0 0.0
    %915 = vmatprep.subr.mxu0 0.0
    %916 = vmatpush1.msra.mxu0 0.0
    %917 = vmatprep.subr.mxu0 0.0
    %918 = vmatpush1.msra.mxu0 0.0
    %919 = vmatprep.subr.mxu0 0.0
    %920 = vmatpush1.msra.mxu0 0.0
    %921 = vmatprep.subr.mxu0 0.0
    %922 = vmatpush1.msra.mxu0 %v714
    %923 = vmatprep.subr.mxu0 0.0
    %924 = vmatpush1.msra.mxu0 %v713
    %925 = vmatprep.subr.mxu0 0.0
    %926 = vmatpush1.msra.mxu0 %v712
    %927 = vmatprep.subr.mxu0 0.0
    %928 = vmatpush1.msra.mxu0 %v711
    %929 = vmatprep.subr.mxu0 0.0
    %930 = vmatpush2.msra.mxu0 0.0
    %931 = vmatprep.subr.mxu0 0.0
    %932 = vmatpush2.msra.mxu0 0.0
    %933 = vmatprep.subr.mxu0 0.0
    %934 = vmatpush2.msra.mxu0 0.0
    %935 = vmatprep.subr.mxu0 0.0
    %936 = vmatpush2.msra.mxu0 0.0
    %937 = vmatprep.subr.mxu0 0.0
    %938 = vmatpush2.msra.mxu0 0.0
    %939 = vmatprep.subr.mxu0 0.0
    %940 = vmatpush2.msra.mxu0 0.0
    %941 = vmatprep.subr.mxu0 0.0
    %942 = vmatpush2.msra.mxu0 0.0
    %943 = vmatprep.subr.mxu0 0.0
    %944 = vmatpush2.msra.mxu0 0.0
    %945 = vmatprep.subr.mxu0 0.0
    %946 = vmatpush2.msra.mxu0 0.0
    %947 = vmatprep.subr.mxu0 0.0
    %948 = vmatpush2.msra.mxu0 0.0
    %949 = vmatprep.subr.mxu0 0.0
    %950 = vmatpush2.msra.mxu0 0.0
    %951 = vmatprep.subr.mxu0 0.0
    %952 = vmatpush2.msra.mxu0 0.0
    %953 = vmatprep.subr.mxu0 0.0
    %954 = vmatpush2.msra.mxu0 0.0
    %955 = vmatprep.subr.mxu0 0.0
    %956 = vmatpush2.msra.mxu0 0.0
    %957 = vmatprep.subr.mxu0 0.0
    %958 = vmatpush2.msra.mxu0 0.0
    %959 = vmatprep.subr.mxu0 0.0
    %960 = vmatpush2.msra.mxu0 0.0
    %961 = vmatprep.mubr.f32.mxu0 0.0
    %962 = vmatmul.mubr.f32.gmra.mxu0 %v895
    %v963 = vpop.f32.mrf.mxu0
    %v964 = vadd.f32 %v738, %v963
    %v965 = vpop.f32.mrf.mxu0
    %966 = vdwg.mxu0
    %v968 = vsel %vm747, %v702, 0
    %970 = vmatprep.subr.mxu0 0.0
    %971 = vmatpush1.msra.mxu0 0.0
    %972 = vmatprep.subr.mxu0 0.0
    %973 = vmatpush1.msra.mxu0 0.0
    %974 = vmatprep.subr.mxu0 0.0
    %975 = vmatpush1.msra.mxu0 0.0
    %976 = vmatprep.subr.mxu0 0.0
    %977 = vmatpush1.msra.mxu0 0.0
    %978 = vmatprep.subr.mxu0 0.0
    %979 = vmatpush1.msra.mxu0 0.0
    %980 = vmatprep.subr.mxu0 0.0
    %981 = vmatpush1.msra.mxu0 0.0
    %982 = vmatprep.subr.mxu0 0.0
    %983 = vmatpush1.msra.mxu0 0.0
    %984 = vmatprep.subr.mxu0 0.0
    %985 = vmatpush1.msra.mxu0 0.0
    %986 = vmatprep.subr.mxu0 0.0
    %987 = vmatpush1.msra.mxu0 0.0
    %988 = vmatprep.subr.mxu0 0.0
    %989 = vmatpush1.msra.mxu0 0.0
    %990 = vmatprep.subr.mxu0 0.0
    %991 = vmatpush1.msra.mxu0 0.0
    %992 = vmatprep.subr.mxu0 0.0
    %993 = vmatpush1.msra.mxu0 0.0
    %994 = vmatprep.subr.mxu0 0.0
    %995 = vmatpush1.msra.mxu0 %v718
    %996 = vmatprep.subr.mxu0 0.0
    %997 = vmatpush1.msra.mxu0 %v717
    %998 = vmatprep.subr.mxu0 0.0
    %999 = vmatpush1.msra.mxu0 %v716
    %1000 = vmatprep.subr.mxu0 0.0
    %1001 = vmatpush1.msra.mxu0 %v715
    %1002 = vmatprep.subr.mxu0 0.0
    %1003 = vmatpush2.msra.mxu0 0.0
    %1004 = vmatprep.subr.mxu0 0.0
    %1005 = vmatpush2.msra.mxu0 0.0
    %1006 = vmatprep.subr.mxu0 0.0
    %1007 = vmatpush2.msra.mxu0 0.0
    %1008 = vmatprep.subr.mxu0 0.0
    %1009 = vmatpush2.msra.mxu0 0.0
    %1010 = vmatprep.subr.mxu0 0.0
    %1011 = vmatpush2.msra.mxu0 0.0
    %1012 = vmatprep.subr.mxu0 0.0
    %1013 = vmatpush2.msra.mxu0 0.0
    %1014 = vmatprep.subr.mxu0 0.0
    %1015 = vmatpush2.msra.mxu0 0.0
    %1016 = vmatprep.subr.mxu0 0.0
    %1017 = vmatpush2.msra.mxu0 0.0
    %1018 = vmatprep.subr.mxu0 0.0
    %1019 = vmatpush2.msra.mxu0 0.0
    %1020 = vmatprep.subr.mxu0 0.0
    %1021 = vmatpush2.msra.mxu0 0.0
    %1022 = vmatprep.subr.mxu0 0.0
    %1023 = vmatpush2.msra.mxu0 0.0
    %1024 = vmatprep.subr.mxu0 0.0
    %1025 = vmatpush2.msra.mxu0 0.0
    %1026 = vmatprep.subr.mxu0 0.0
    %1027 = vmatpush2.msra.mxu0 0.0
    %1028 = vmatprep.subr.mxu0 0.0
    %1029 = vmatpush2.msra.mxu0 0.0
    %1030 = vmatprep.subr.mxu0 0.0
    %1031 = vmatpush2.msra.mxu0 0.0
    %1032 = vmatprep.subr.mxu0 0.0
    %1033 = vmatpush2.msra.mxu0 0.0
    %1034 = vmatprep.mubr.f32.mxu0 0.0
    %1035 = vmatmul.mubr.f32.gmra.mxu0 %v968
    %v1036 = vpop.f32.mrf.mxu0
    %v1037 = vadd.f32 %v742, %v1036
    %v1038 = vpop.f32.mrf.mxu0
    %1039 = vdwg.mxu0
    %v1040 = vmax.f32 %v818, 0.0
    %v1041 = vmax.f32 %v891, 0.0
    %v1042 = vmax.f32 %v964, 0.0
    %v1043 = vmax.f32 %v1037, 0.0
    %v1044 = vld [vmem:[%s6] sm:$0xff]
    %v1045 = vld [vmem:[%s6 + $0x8] sm:$0xff]
    %v1046 = vld [vmem:[%s6 + $0x10] sm:$0xff]
    %v1047 = vld [vmem:[%s6 + $0x18] sm:$0xff]
    %v1048 = vld [vmem:[%s6 + $0x20] sm:$0xff]
    %v1049 = vld [vmem:[%s6 + $0x28] sm:$0xff]
    %v1050 = vld [vmem:[%s6 + $0x30] sm:$0xff]
    %v1051 = vld [vmem:[%s6 + $0x38] sm:$0xff]
    %v1052 = vld [vmem:[%s6 + $0x40] sm:$0xff]
    %v1053 = vld [vmem:[%s6 + $0x48] sm:$0xff]
    %v1054 = vld [vmem:[%s6 + $0x50] sm:$0xff]
    %v1055 = vld [vmem:[%s6 + $0x58] sm:$0xff]
    %v1056 = vld [vmem:[%s6 + $0x60] sm:$0xff]
    %v1057 = vld [vmem:[%s6 + $0x68] sm:$0xff]
    %v1058 = vld [vmem:[%s6 + $0x70] sm:$0xff]
    %v1059 = vld [vmem:[%s6 + $0x78] sm:$0xff]
    %v1060 = vld [vmem:[%s7] sm:$0x1]
    %v1061 = vld [vmem:[%s7 + $0x1] sm:$0x1]
    %v1062 = vld [vmem:[%s7 + $0x2] sm:$0x1]
    %v1063 = vld [vmem:[%s7 + $0x3] sm:$0x1]
    %v1068 = vlaneseq
    %v1069 = vshrl.u32 %v1068, 7
    %v1070 = vsub.s32 0, %v1069
    %v1071 = vrot.slane %v1060, %v1070
    %v1072 = vlaneseq
    %v1073 = vshrl.u32 %v1072, 7
    %v1074 = vsub.s32 0, %v1073
    %v1075 = vrot.slane %v1061, %v1074
    %v1076 = vlaneseq
    %v1077 = vshrl.u32 %v1076, 7
    %v1078 = vsub.s32 0, %v1077
    %v1079 = vrot.slane %v1062, %v1078
    %v1080 = vlaneseq
    %v1081 = vshrl.u32 %v1080, 7
    %v1082 = vsub.s32 0, %v1081
    %v1083 = vrot.slane %v1063, %v1082
    %v1089 = vsel %vm747, %v1040, 0
    %1091 = vmatprep.subr.mxu0 0.0
    %1092 = vmatpush1.msra.mxu0 0.0
    %1093 = vmatprep.subr.mxu0 0.0
    %1094 = vmatpush1.msra.mxu0 0.0
    %1095 = vmatprep.subr.mxu0 0.0
    %1096 = vmatpush1.msra.mxu0 0.0
    %1097 = vmatprep.subr.mxu0 0.0
    %1098 = vmatpush1.msra.mxu0 0.0
    %1099 = vmatprep.subr.mxu0 0.0
    %1100 = vmatpush1.msra.mxu0 0.0
    %1101 = vmatprep.subr.mxu0 0.0
    %1102 = vmatpush1.msra.mxu0 0.0
    %1103 = vmatprep.subr.mxu0 0.0
    %1104 = vmatpush1.msra.mxu0 0.0
    %1105 = vmatprep.subr.mxu0 0.0
    %1106 = vmatpush1.msra.mxu0 0.0
    %1107 = vmatprep.subr.mxu0 0.0
    %1108 = vmatpush1.msra.mxu0 0.0
    %1109 = vmatprep.subr.mxu0 0.0
    %1110 = vmatpush1.msra.mxu0 0.0
    %1111 = vmatprep.subr.mxu0 0.0
    %1112 = vmatpush1.msra.mxu0 0.0
    %1113 = vmatprep.subr.mxu0 0.0
    %1114 = vmatpush1.msra.mxu0 0.0
    %1115 = vmatprep.subr.mxu0 0.0
    %1116 = vmatpush1.msra.mxu0 %v1047
    %1117 = vmatprep.subr.mxu0 0.0
    %1118 = vmatpush1.msra.mxu0 %v1046
    %1119 = vmatprep.subr.mxu0 0.0
    %1120 = vmatpush1.msra.mxu0 %v1045
    %1121 = vmatprep.subr.mxu0 0.0
    %1122 = vmatpush1.msra.mxu0 %v1044
    %1123 = vmatprep.subr.mxu0 0.0
    %1124 = vmatpush2.msra.mxu0 0.0
    %1125 = vmatprep.subr.mxu0 0.0
    %1126 = vmatpush2.msra.mxu0 0.0
    %1127 = vmatprep.subr.mxu0 0.0
    %1128 = vmatpush2.msra.mxu0 0.0
    %1129 = vmatprep.subr.mxu0 0.0
    %1130 = vmatpush2.msra.mxu0 0.0
    %1131 = vmatprep.subr.mxu0 0.0
    %1132 = vmatpush2.msra.mxu0 0.0
    %1133 = vmatprep.subr.mxu0 0.0
    %1134 = vmatpush2.msra.mxu0 0.0
    %1135 = vmatprep.subr.mxu0 0.0
    %1136 = vmatpush2.msra.mxu0 0.0
    %1137 = vmatprep.subr.mxu0 0.0
    %1138 = vmatpush2.msra.mxu0 0.0
    %1139 = vmatprep.subr.mxu0 0.0
    %1140 = vmatpush2.msra.mxu0 0.0
    %1141 = vmatprep.subr.mxu0 0.0
    %1142 = vmatpush2.msra.mxu0 0.0
    %1143 = vmatprep.subr.mxu0 0.0
    %1144 = vmatpush2.msra.mxu0 0.0
    %1145 = vmatprep.subr.mxu0 0.0
    %1146 = vmatpush2.msra.mxu0 0.0
    %1147 = vmatprep.subr.mxu0 0.0
    %1148 = vmatpush2.msra.mxu0 0.0
    %1149 = vmatprep.subr.mxu0 0.0
    %1150 = vmatpush2.msra.mxu0 0.0
    %1151 = vmatprep.subr.mxu0 0.0
    %1152 = vmatpush2.msra.mxu0 0.0
    %1153 = vmatprep.subr.mxu0 0.0
    %1154 = vmatpush2.msra.mxu0 0.0
    %1155 = vmatprep.mubr.f32.mxu0 0.0
    %1156 = vmatmul.mubr.f32.gmra.mxu0 %v1089
    %v1157 = vpop.f32.mrf.mxu0
    %v1158 = vadd.f32 %v1071, %v1157
    %v1159 = vpop.f32.mrf.mxu0
    %1160 = vdwg.mxu0
    %v1162 = vsel %vm747, %v1041, 0
    %1164 = vmatprep.subr.mxu0 0.0
    %1165 = vmatpush1.msra.mxu0 0.0
    %1166 = vmatprep.subr.mxu0 0.0
    %1167 = vmatpush1.msra.mxu0 0.0
    %1168 = vmatprep.subr.mxu0 0.0
    %1169 = vmatpush1.msra.mxu0 0.0
    %1170 = vmatprep.subr.mxu0 0.0
    %1171 = vmatpush1.msra.mxu0 0.0
    %1172 = vmatprep.subr.mxu0 0.0
    %1173 = vmatpush1.msra.mxu0 0.0
    %1174 = vmatprep.subr.mxu0 0.0
    %1175 = vmatpush1.msra.mxu0 0.0
    %1176 = vmatprep.subr.mxu0 0.0
    %1177 = vmatpush1.msra.mxu0 0.0
    %1178 = vmatprep.subr.mxu0 0.0
    %1179 = vmatpush1.msra.mxu0 0.0
    %1180 = vmatprep.subr.mxu0 0.0
    %1181 = vmatpush1.msra.mxu0 0.0
    %1182 = vmatprep.subr.mxu0 0.0
    %1183 = vmatpush1.msra.mxu0 0.0
    %1184 = vmatprep.subr.mxu0 0.0
    %1185 = vmatpush1.msra.mxu0 0.0
    %1186 = vmatprep.subr.mxu0 0.0
    %1187 = vmatpush1.msra.mxu0 0.0
    %1188 = vmatprep.subr.mxu0 0.0
    %1189 = vmatpush1.msra.mxu0 %v1051
    %1190 = vmatprep.subr.mxu0 0.0
    %1191 = vmatpush1.msra.mxu0 %v1050
    %1192 = vmatprep.subr.mxu0 0.0
    %1193 = vmatpush1.msra.mxu0 %v1049
    %1194 = vmatprep.subr.mxu0 0.0
    %1195 = vmatpush1.msra.mxu0 %v1048
    %1196 = vmatprep.subr.mxu0 0.0
    %1197 = vmatpush2.msra.mxu0 0.0
    %1198 = vmatprep.subr.mxu0 0.0
    %1199 = vmatpush2.msra.mxu0 0.0
    %1200 = vmatprep.subr.mxu0 0.0
    %1201 = vmatpush2.msra.mxu0 0.0
    %1202 = vmatprep.subr.mxu0 0.0
    %1203 = vmatpush2.msra.mxu0 0.0
    %1204 = vmatprep.subr.mxu0 0.0
    %1205 = vmatpush2.msra.mxu0 0.0
    %1206 = vmatprep.subr.mxu0 0.0
    %1207 = vmatpush2.msra.mxu0 0.0
    %1208 = vmatprep.subr.mxu0 0.0
    %1209 = vmatpush2.msra.mxu0 0.0
    %1210 = vmatprep.subr.mxu0 0.0
    %1211 = vmatpush2.msra.mxu0 0.0
    %1212 = vmatprep.subr.mxu0 0.0
    %1213 = vmatpush2.msra.mxu0 0.0
    %1214 = vmatprep.subr.mxu0 0.0
    %1215 = vmatpush2.msra.mxu0 0.0
    %1216 = vmatprep.subr.mxu0 0.0
    %1217 = vmatpush2.msra.mxu0 0.0
    %1218 = vmatprep.subr.mxu0 0.0
    %1219 = vmatpush2.msra.mxu0 0.0
    %1220 = vmatprep.subr.mxu0 0.0
    %1221 = vmatpush2.msra.mxu0 0.0
    %1222 = vmatprep.subr.mxu0 0.0
    %1223 = vmatpush2.msra.mxu0 0.0
    %1224 = vmatprep.subr.mxu0 0.0
    %1225 = vmatpush2.msra.mxu0 0.0
    %1226 = vmatprep.subr.mxu0 0.0
    %1227 = vmatpush2.msra.mxu0 0.0
    %1228 = vmatprep.mubr.f32.mxu0 0.0
    %1229 = vmatmul.mubr.f32.gmra.mxu0 %v1162
    %v1230 = vpop.f32.mrf.mxu0
    %v1231 = vadd.f32 %v1075, %v1230
    %v1232 = vpop.f32.mrf.mxu0
    %1233 = vdwg.mxu0
    %v1235 = vsel %vm747, %v1042, 0
    %1237 = vmatprep.subr.mxu0 0.0
    %1238 = vmatpush1.msra.mxu0 0.0
    %1239 = vmatprep.subr.mxu0 0.0
    %1240 = vmatpush1.msra.mxu0 0.0
    %1241 = vmatprep.subr.mxu0 0.0
    %1242 = vmatpush1.msra.mxu0 0.0
    %1243 = vmatprep.subr.mxu0 0.0
    %1244 = vmatpush1.msra.mxu0 0.0
    %1245 = vmatprep.subr.mxu0 0.0
    %1246 = vmatpush1.msra.mxu0 0.0
    %1247 = vmatprep.subr.mxu0 0.0
    %1248 = vmatpush1.msra.mxu0 0.0
    %1249 = vmatprep.subr.mxu0 0.0
    %1250 = vmatpush1.msra.mxu0 0.0
    %1251 = vmatprep.subr.mxu0 0.0
    %1252 = vmatpush1.msra.mxu0 0.0
    %1253 = vmatprep.subr.mxu0 0.0
    %1254 = vmatpush1.msra.mxu0 0.0
    %1255 = vmatprep.subr.mxu0 0.0
    %1256 = vmatpush1.msra.mxu0 0.0
    %1257 = vmatprep.subr.mxu0 0.0
    %1258 = vmatpush1.msra.mxu0 0.0
    %1259 = vmatprep.subr.mxu0 0.0
    %1260 = vmatpush1.msra.mxu0 0.0
    %1261 = vmatprep.subr.mxu0 0.0
    %1262 = vmatpush1.msra.mxu0 %v1055
    %1263 = vmatprep.subr.mxu0 0.0
    %1264 = vmatpush1.msra.mxu0 %v1054
    %1265 = vmatprep.subr.mxu0 0.0
    %1266 = vmatpush1.msra.mxu0 %v1053
    %1267 = vmatprep.subr.mxu0 0.0
    %1268 = vmatpush1.msra.mxu0 %v1052
    %1269 = vmatprep.subr.mxu0 0.0
    %1270 = vmatpush2.msra.mxu0 0.0
    %1271 = vmatprep.subr.mxu0 0.0
    %1272 = vmatpush2.msra.mxu0 0.0
    %1273 = vmatprep.subr.mxu0 0.0
    %1274 = vmatpush2.msra.mxu0 0.0
    %1275 = vmatprep.subr.mxu0 0.0
    %1276 = vmatpush2.msra.mxu0 0.0
    %1277 = vmatprep.subr.mxu0 0.0
    %1278 = vmatpush2.msra.mxu0 0.0
    %1279 = vmatprep.subr.mxu0 0.0
    %1280 = vmatpush2.msra.mxu0 0.0
    %1281 = vmatprep.subr.mxu0 0.0
    %1282 = vmatpush2.msra.mxu0 0.0
    %1283 = vmatprep.subr.mxu0 0.0
    %1284 = vmatpush2.msra.mxu0 0.0
    %1285 = vmatprep.subr.mxu0 0.0
    %1286 = vmatpush2.msra.mxu0 0.0
    %1287 = vmatprep.subr.mxu0 0.0
    %1288 = vmatpush2.msra.mxu0 0.0
    %1289 = vmatprep.subr.mxu0 0.0
    %1290 = vmatpush2.msra.mxu0 0.0
    %1291 = vmatprep.subr.mxu0 0.0
    %1292 = vmatpush2.msra.mxu0 0.0
    %1293 = vmatprep.subr.mxu0 0.0
    %1294 = vmatpush2.msra.mxu0 0.0
    %1295 = vmatprep.subr.mxu0 0.0
    %1296 = vmatpush2.msra.mxu0 0.0
    %1297 = vmatprep.subr.mxu0 0.0
    %1298 = vmatpush2.msra.mxu0 0.0
    %1299 = vmatprep.subr.mxu0 0.0
    %1300 = vmatpush2.msra.mxu0 0.0
    %1301 = vmatprep.mubr.f32.mxu0 0.0
    %1302 = vmatmul.mubr.f32.gmra.mxu0 %v1235
    %v1303 = vpop.f32.mrf.mxu0
    %v1304 = vadd.f32 %v1079, %v1303
    %v1305 = vpop.f32.mrf.mxu0
    %1306 = vdwg.mxu0
    %v1308 = vsel %vm747, %v1043, 0
    %1310 = vmatprep.subr.mxu0 0.0
    %1311 = vmatpush1.msra.mxu0 0.0
    %1312 = vmatprep.subr.mxu0 0.0
    %1313 = vmatpush1.msra.mxu0 0.0
    %1314 = vmatprep.subr.mxu0 0.0
    %1315 = vmatpush1.msra.mxu0 0.0
    %1316 = vmatprep.subr.mxu0 0.0
    %1317 = vmatpush1.msra.mxu0 0.0
    %1318 = vmatprep.subr.mxu0 0.0
    %1319 = vmatpush1.msra.mxu0 0.0
    %1320 = vmatprep.subr.mxu0 0.0
    %1321 = vmatpush1.msra.mxu0 0.0
    %1322 = vmatprep.subr.mxu0 0.0
    %1323 = vmatpush1.msra.mxu0 0.0
    %1324 = vmatprep.subr.mxu0 0.0
    %1325 = vmatpush1.msra.mxu0 0.0
    %1326 = vmatprep.subr.mxu0 0.0
    %1327 = vmatpush1.msra.mxu0 0.0
    %1328 = vmatprep.subr.mxu0 0.0
    %1329 = vmatpush1.msra.mxu0 0.0
    %1330 = vmatprep.subr.mxu0 0.0
    %1331 = vmatpush1.msra.mxu0 0.0
    %1332 = vmatprep.subr.mxu0 0.0
    %1333 = vmatpush1.msra.mxu0 0.0
    %1334 = vmatprep.subr.mxu0 0.0
    %1335 = vmatpush1.msra.mxu0 %v1059
    %1336 = vmatprep.subr.mxu0 0.0
    %1337 = vmatpush1.msra.mxu0 %v1058
    %1338 = vmatprep.subr.mxu0 0.0
    %1339 = vmatpush1.msra.mxu0 %v1057
    %1340 = vmatprep.subr.mxu0 0.0
    %1341 = vmatpush1.msra.mxu0 %v1056
    %1342 = vmatprep.subr.mxu0 0.0
    %1343 = vmatpush2.msra.mxu0 0.0
    %1344 = vmatprep.subr.mxu0 0.0
    %1345 = vmatpush2.msra.mxu0 0.0
    %1346 = vmatprep.subr.mxu0 0.0
    %1347 = vmatpush2.msra.mxu0 0.0
    %1348 = vmatprep.subr.mxu0 0.0
    %1349 = vmatpush2.msra.mxu0 0.0
    %1350 = vmatprep.subr.mxu0 0.0
    %1351 = vmatpush2.msra.mxu0 0.0
    %1352 = vmatprep.subr.mxu0 0.0
    %1353 = vmatpush2.msra.mxu0 0.0
    %1354 = vmatprep.subr.mxu0 0.0
    %1355 = vmatpush2.msra.mxu0 0.0
    %1356 = vmatprep.subr.mxu0 0.0
    %1357 = vmatpush2.msra.mxu0 0.0
    %1358 = vmatprep.subr.mxu0 0.0
    %1359 = vmatpush2.msra.mxu0 0.0
    %1360 = vmatprep.subr.mxu0 0.0
    %1361 = vmatpush2.msra.mxu0 0.0
    %1362 = vmatprep.subr.mxu0 0.0
    %1363 = vmatpush2.msra.mxu0 0.0
    %1364 = vmatprep.subr.mxu0 0.0
    %1365 = vmatpush2.msra.mxu0 0.0
    %1366 = vmatprep.subr.mxu0 0.0
    %1367 = vmatpush2.msra.mxu0 0.0
    %1368 = vmatprep.subr.mxu0 0.0
    %1369 = vmatpush2.msra.mxu0 0.0
    %1370 = vmatprep.subr.mxu0 0.0
    %1371 = vmatpush2.msra.mxu0 0.0
    %1372 = vmatprep.subr.mxu0 0.0
    %1373 = vmatpush2.msra.mxu0 0.0
    %1374 = vmatprep.mubr.f32.mxu0 0.0
    %1375 = vmatmul.mubr.f32.gmra.mxu0 %v1308
    %v1376 = vpop.f32.mrf.mxu0
    %v1377 = vadd.f32 %v1083, %v1376
    %v1378 = vpop.f32.mrf.mxu0
    %1379 = vdwg.mxu0
    %vm1380 = vcmask 64512
    %1381 = vst.msk [vmem:[#allocation7] sm:$0xff] %vm1380, %v1158
    %1382 = vst.msk [vmem:[#allocation7 + $0x8] sm:$0xff] %vm1380, %v1231
    %1383 = vst.msk [vmem:[#allocation7 + $0x10] sm:$0xff] %vm1380, %v1304
    %1384 = vst.msk [vmem:[#allocation7 + $0x18] sm:$0xff] %vm1380, %v1377
    // Predicated region
    $region42: #{tpu_custom_call.1} parent=1 // pred_check
      _
    $region43: #{tpu_custom_call.1} parent=1 // pred_check_branch
      %1386 = sbr.rel (0) target = $region45
    $region44: #{tpu_custom_call.1} parent=1 // pred_region
      %s1388 = ssub.s32 512, 512
      %1389 = vsyncadd [#allocation4], %s1388
      %s1390 = sshll.u32 [#allocation7], 4
      %s1391 = int_to_ptr.vmem [resolvable:$true] %s1390
      %1396 = dma.vmem_to_hbm [thread:$0]  %s1391, 512, %s8, [#allocation4], 128, 128, 8
    $region45: #{tpu_custom_call.1} parent=1 // pred_fallthru
      _
    // Predicated region
    $region46: #{tpu_custom_call.1} parent=1 // pred_check
      _
    $region47: #{tpu_custom_call.1} parent=1 // pred_check_branch
      %1398 = sbr.rel (0) target = $region49
    $region48: #{tpu_custom_call.1} parent=1 // pred_region
      %1399 = dma.done [#allocation4], 512
    $region49: #{tpu_custom_call.1} parent=1 // pred_fallthru
      _
    %1400 = vsyncpa [#allocation3], 1
    %1401 = vsyncpa [#allocation6], 1
    %1402 = vsyncpa [#allocation4], 1

</llo_original>
